<compile_context>
chip_gen: v5e
topology: v5e:2x2
jax: 0.10.0
libtpu: 0.0.40
codegen_flags: <defaults>
</compile_context>

<pallas_src>
import functools

import jax
import jax.numpy as jnp
from jax import lax
from jax.experimental import pallas as pl
from jax.experimental.pallas import tpu as pltpu


_LOSS_WEIGHTS = {"video": 1.0, "audio": 0.5, "actions": 2.0,
                 "proprioception": 1.5, "text": 0.3}
_LOSS_TYPES = {"audio": "l1", "actions": "mse", "proprioception": "smooth_l1",
               "text": "ce", "video": "mse"}


# ---------------------------------------------------------------------------
# Fused Pallas kernel: reconstruction + temporal + uncertainty-reg + contrastive
# ---------------------------------------------------------------------------

def _fused_loss_kernel(pred_ref, tgt_ref, unc_ref, out_ref, *,
                       loss_types, weights, d,
                       temporal_weight, uncertainty_weight,
                       contrastive_weight, inv_temp):
    """One kernel, one scalar out.

    pred_ref / tgt_ref : (B, T, n_mod*d) f32 VMEM  (text target block = one-hot)
    unc_ref            : (B, T, n_mod)   f32 VMEM
    out_ref            : (1, 1)          f32 SMEM  (total weighted loss)
    """
    pred = pred_ref[...]
    tgt = tgt_ref[...]
    unc = unc_ref[...]
    B, T, F = pred.shape
    n_mod = len(loss_types)
    N = B * T

    # ---- shared elementwise passes over the full lane-dense slab -------------
    diff = pred - tgt
    ad = jnp.abs(diff)
    sq = diff * diff
    prec = jnp.exp(-unc)                               # (B, T, n_mod), one EUP pass

    # ---- per-modality reconstruction (uncertainty-weighted), weighted sum ----
    total = 0.0
    inv_d = 1.0 / d
    for k, (lt, w) in enumerate(zip(loss_types, weights)):
        lo = k * d
        if lt == "mse":
            per = jnp.sum(sq[:, :, lo:lo + d], axis=-1, keepdims=True) * inv_d
        elif lt == "l1":
            per = jnp.sum(ad[:, :, lo:lo + d], axis=-1, keepdims=True) * inv_d
        elif lt == "smooth_l1":
            blk_ad = ad[:, :, lo:lo + d]
            blk_sq = sq[:, :, lo:lo + d]
            sl1 = jnp.where(blk_ad < 1.0, 0.5 * blk_sq, blk_ad - 0.5)
            per = jnp.sum(sl1, axis=-1, keepdims=True) * inv_d
        elif lt == "ce":
            logits = pred[:, :, lo:lo + d]
            onehot = tgt[:, :, lo:lo + d]
            m = jnp.max(logits, axis=-1, keepdims=True)
            lse = jnp.log(jnp.sum(jnp.exp(logits - m), axis=-1, keepdims=True)) + m
            per = lse - jnp.sum(logits * onehot, axis=-1, keepdims=True)
        else:
            raise ValueError(f"unknown loss type {lt}")
        u = unc[:, :, k:k + 1]
        p = prec[:, :, k:k + 1]
        total = total + w * jnp.mean(p * per + u)

    # ---- temporal consistency (single shared sqrt pass over all modalities) --
    if temporal_weight > 0.0 and T > 1:
        dt = pred[:, 1:, :] - pred[:, :-1, :]
        dt2 = dt * dt
        seg_sums = jnp.concatenate(
            [jnp.sum(dt2[:, :, k * d:(k + 1) * d], axis=-1, keepdims=True)
             for k in range(n_mod)], axis=-1)          # (B, T-1, n_mod)
        # TODO(synk): torch.norm -> sqrt(0) has a NaN gradient; forward value matches
        # the reference exactly, add an eps before wiring a backward pass.
        temporal = jnp.mean(jnp.sqrt(seg_sums))        # mean over pairs == mean of per-modality means
        total = total + temporal_weight * temporal

    # ---- uncertainty regularization: sum_k mean|u_k| == n_mod * mean|u| ------
    if uncertainty_weight > 0.0:
        total = total + uncertainty_weight * (n_mod * jnp.mean(jnp.abs(unc)))

    # ---- contrastive: one normalization pass + ONE batched MXU matmul --------
    if contrastive_weight > 0.0 and n_mod >= 2:
        psq = pred * pred
        lane = lax.broadcasted_iota(jnp.int32, pred.shape, 2)
        seg_norm = jnp.concatenate(
            [jnp.sum(psq[:, :, k * d:(k + 1) * d], axis=-1, keepdims=True)
             for k in range(n_mod)], axis=-1)          # (B, T, n_mod)
        inv_norm = 1.0 / jnp.maximum(jnp.sqrt(seg_norm), 1e-12)   # F.normalize eps
        scale = inv_norm[:, :, 0:1]
        for k in range(1, n_mod):
            scale = jnp.where(lane >= k * d, inv_norm[:, :, k:k + 1], scale)
        pred_n = pred * scale                          # normalized lane-dense slab

        pn2 = pred_n.reshape(N, F)                     # major-dim collapse, free
        # stack modality streams along rows: (n_mod*N, d)
        stack = jnp.concatenate(
            [pn2[:, k * d:(k + 1) * d] for k in range(n_mod)], axis=0)
        # single matmul, RHS contracted on its last dim (no transpose/relayout)
        sim = lax.dot_general(stack, stack,
                              (((1,), (1,)), ((), ())),
                              preferred_element_type=jnp.float32) * inv_temp

        r = lax.broadcasted_iota(jnp.int32, (N, N), 0)
        c = lax.broadcasted_iota(jnp.int32, (N, N), 1)
        diag_mask = (r == c)

        contrast = 0.0
        n_pairs = 0
        for i in range(n_mod):
            for j in range(i + 1, n_mod):
                blk = sim[i * N:(i + 1) * N, j * N:(j + 1) * N]      # (N, N)
                m = jnp.max(blk, axis=-1, keepdims=True)
                lse = jnp.log(jnp.sum(jnp.exp(blk - m), axis=-1, keepdims=True)) + m
                dg = jnp.sum(jnp.where(diag_mask, blk, 0.0), axis=-1, keepdims=True)
                contrast = contrast + jnp.mean(lse - dg)
                n_pairs += 1
        total = total + contrastive_weight * (contrast / n_pairs)

    out_ref[0, 0] = total


# ---------------------------------------------------------------------------
# AdvancedWorldModelLoss.forward — single pallas_call over packed slabs
# ---------------------------------------------------------------------------

def advanced_world_model_loss(outputs, targets, *, temporal_weight=0.1,
                              uncertainty_weight=0.01, contrastive_weight=0.1,
                              temperature=0.07):
    predictions = outputs.get("predictions", {})
    uncertainties = outputs.get("uncertainty_estimates", {})
    mods = list(predictions.keys())

    # all modalities must share (B, T, D) with equal D (required by the
    # reference ContrastiveLoss matmul as well).
    B, T, D = predictions[mods[0]].shape
    for m in mods:
        assert predictions[m].shape == (B, T, D), "equal feature dims required"

    pred_packed = jnp.concatenate(
        [predictions[m].astype(jnp.float32) for m in mods], axis=-1)      # (B,T,n*D)

    tgt_blocks = []
    for m in mods:
        if _LOSS_TYPES.get(m, "mse") == "ce":
            # layout prep only: one-hot token ids so the in-kernel CE gather is a
            # lane-dense multiply+reduce (no int tile / iota-compare in the kernel).
            tgt_blocks.append(jax.nn.one_hot(targets[m], D, dtype=jnp.float32))
        else:
            tgt_blocks.append(targets[m].astype(jnp.float32))
    tgt_packed = jnp.concatenate(tgt_blocks, axis=-1)                     # (B,T,n*D)

    unc_blocks = []
    for m in mods:
        u = uncertainties.get(m)
        if u is None:                       # exp(0)*loss + 0 == loss, reg adds 0
            u = jnp.zeros((B, T, 1), jnp.float32)
        unc_blocks.append(u.astype(jnp.float32))
    unc_packed = jnp.concatenate(unc_blocks, axis=-1)                     # (B,T,n)

    loss_types = tuple(_LOSS_TYPES.get(m, "mse") for m in mods)
    weights = tuple(float(_LOSS_WEIGHTS.get(m, 1.0)) for m in mods)

    kernel = functools.partial(
        _fused_loss_kernel,
        loss_types=loss_types, weights=weights, d=D,
        temporal_weight=float(temporal_weight),
        uncertainty_weight=float(uncertainty_weight) if uncertainties else 0.0,
        contrastive_weight=float(contrastive_weight) if len(mods) >= 2 else 0.0,
        inv_temp=1.0 / float(temperature))

    out = pl.pallas_call(
        kernel,
        out_shape=jax.ShapeDtypeStruct((1, 1), jnp.float32),
        in_specs=[pl.BlockSpec(memory_space=pltpu.MemorySpace.VMEM)] * 3,
        out_specs=pl.BlockSpec(memory_space=pltpu.MemorySpace.SMEM),
    )(pred_packed, tgt_packed, unc_packed)
    return out[0, 0]


# ---------------------------------------------------------------------------
# demo
# ---------------------------------------------------------------------------

if __name__ == "__main__":
    key = jax.random.PRNGKey(0)
    B, T, D, V = 2, 8, 32, 32
    ks = jax.random.split(key, 12)

    predictions = {
        "audio":          jax.random.normal(ks[0], (B, T, D), jnp.float32),
        "actions":        jax.random.normal(ks[1], (B, T, D), jnp.float32),
        "proprioception": jax.random.normal(ks[2], (B, T, D), jnp.float32),
        "text":           jax.random.normal(ks[3], (B, T, V), jnp.float32),
    }
    targets = {
        "audio":          jax.random.normal(ks[4], (B, T, D), jnp.float32),
        "actions":        jax.random.normal(ks[5], (B, T, D), jnp.float32),
        "proprioception": jax.random.normal(ks[6], (B, T, D), jnp.float32),
        "text":           jax.random.randint(ks[7], (B, T), 0, V, jnp.int32),
    }
    uncertainties = {
        "audio":          0.1 * jax.random.normal(ks[8],  (B, T, 1), jnp.float32),
        "actions":        0.1 * jax.random.normal(ks[9],  (B, T, 1), jnp.float32),
        "proprioception": 0.1 * jax.random.normal(ks[10], (B, T, 1), jnp.float32),
        "text":           0.1 * jax.random.normal(ks[11], (B, T, 1), jnp.float32),
    }

    outputs = {"predictions": predictions, "uncertainty_estimates": uncertainties}

    loss = advanced_world_model_loss(outputs, targets)
    jax.block_until_ready(loss)
    print("KERNEL_OK")
</pallas_src>

<mosaic_0001>
module attributes {stable_mosaic.version = 11 : i64} {
  func.func @_fused_loss_kernel(%arg0: memref<2x8x128xf32, #tpu.memory_space<vmem>>, %arg1: memref<2x8x128xf32, #tpu.memory_space<vmem>>, %arg2: memref<2x8x4xf32, #tpu.memory_space<vmem>>, %arg3: memref<1x1xf32, #tpu.memory_space<smem>>) attributes {dimension_semantics = [], scalar_prefetch = 0 : i64, scratch_operands = 0 : i64, tpu.core_type = #tpu.core_type<tc>} {
    %c0 = arith.constant 0 : index
    %c0_0 = arith.constant 0 : index
    %c0_1 = arith.constant 0 : index
    %0 = vector.load %arg0[%c0, %c0_0, %c0_1] : memref<2x8x128xf32, #tpu.memory_space<vmem>>, vector<2x8x128xf32>
    %c0_2 = arith.constant 0 : index
    %c0_3 = arith.constant 0 : index
    %c0_4 = arith.constant 0 : index
    %1 = vector.load %arg1[%c0_2, %c0_3, %c0_4] : memref<2x8x128xf32, #tpu.memory_space<vmem>>, vector<2x8x128xf32>
    %c0_5 = arith.constant 0 : index
    %c0_6 = arith.constant 0 : index
    %c0_7 = arith.constant 0 : index
    %2 = vector.load %arg2[%c0_5, %c0_6, %c0_7] : memref<2x8x4xf32, #tpu.memory_space<vmem>>, vector<2x8x4xf32>
    %3 = arith.subf %0, %1 : vector<2x8x128xf32>
    %4 = math.absf %3 : vector<2x8x128xf32>
    %5 = arith.mulf %3, %3 : vector<2x8x128xf32>
    %cst = arith.constant 0.000000e+00 : f32
    %6 = vector.broadcast %cst : f32 to vector<2x8x4xf32>
    %7 = arith.subf %6, %2 : vector<2x8x4xf32>
    %8 = math.exp %7 : vector<2x8x4xf32>
    %9 = vector.extract_strided_slice %4 {offsets = [0, 0, 0], sizes = [2, 8, 32], strides = [1, 1, 1]} : vector<2x8x128xf32> to vector<2x8x32xf32>
    %cst_8 = arith.constant dense<0.000000e+00> : vector<2x8xf32>
    %10 = vector.multi_reduction <add>, %9, %cst_8 [2] : vector<2x8x32xf32> to vector<2x8xf32>
    %11 = vector.shape_cast %10 : vector<2x8xf32> to vector<2x8x1xf32>
    %cst_9 = arith.constant 3.125000e-02 : f32
    %12 = vector.broadcast %cst_9 : f32 to vector<2x8x1xf32>
    %13 = arith.mulf %11, %12 : vector<2x8x1xf32>
    %14 = vector.extract_strided_slice %2 {offsets = [0, 0, 0], sizes = [2, 8, 1], strides = [1, 1, 1]} : vector<2x8x4xf32> to vector<2x8x1xf32>
    %15 = vector.extract_strided_slice %8 {offsets = [0, 0, 0], sizes = [2, 8, 1], strides = [1, 1, 1]} : vector<2x8x4xf32> to vector<2x8x1xf32>
    %16 = arith.mulf %15, %13 : vector<2x8x1xf32>
    %17 = arith.addf %16, %14 : vector<2x8x1xf32>
    %18 = vector.shape_cast %17 : vector<2x8x1xf32> to vector<1x2x8x1xf32>
    %cst_10 = arith.constant dense<0.000000e+00> : vector<1xf32>
    %19 = vector.multi_reduction <add>, %18, %cst_10 [1, 2, 3] : vector<1x2x8x1xf32> to vector<1xf32>
    %20 = vector.shape_cast %19 : vector<1xf32> to vector<1x1x1x1xf32>
    %21 = vector.extract %20[0, 0, 0, 0] : f32 from vector<1x1x1x1xf32>
    %cst_11 = arith.constant 1.600000e+01 : f32
    %22 = arith.divf %21, %cst_11 : f32
    %cst_12 = arith.constant 5.000000e-01 : f32
    %23 = arith.mulf %cst_12, %22 : f32
    %cst_13 = arith.constant 0.000000e+00 : f32
    %24 = arith.addf %cst_13, %23 : f32
    %25 = vector.extract_strided_slice %5 {offsets = [0, 0, 32], sizes = [2, 8, 32], strides = [1, 1, 1]} : vector<2x8x128xf32> to vector<2x8x32xf32>
    %cst_14 = arith.constant dense<0.000000e+00> : vector<2x8xf32>
    %26 = vector.multi_reduction <add>, %25, %cst_14 [2] : vector<2x8x32xf32> to vector<2x8xf32>
    %27 = vector.shape_cast %26 : vector<2x8xf32> to vector<2x8x1xf32>
    %cst_15 = arith.constant 3.125000e-02 : f32
    %28 = vector.broadcast %cst_15 : f32 to vector<2x8x1xf32>
    %29 = arith.mulf %27, %28 : vector<2x8x1xf32>
    %30 = vector.extract_strided_slice %2 {offsets = [0, 0, 1], sizes = [2, 8, 1], strides = [1, 1, 1]} : vector<2x8x4xf32> to vector<2x8x1xf32>
    %31 = vector.extract_strided_slice %8 {offsets = [0, 0, 1], sizes = [2, 8, 1], strides = [1, 1, 1]} : vector<2x8x4xf32> to vector<2x8x1xf32>
    %32 = arith.mulf %31, %29 : vector<2x8x1xf32>
    %33 = arith.addf %32, %30 : vector<2x8x1xf32>
    %34 = vector.shape_cast %33 : vector<2x8x1xf32> to vector<1x2x8x1xf32>
    %cst_16 = arith.constant dense<0.000000e+00> : vector<1xf32>
    %35 = vector.multi_reduction <add>, %34, %cst_16 [1, 2, 3] : vector<1x2x8x1xf32> to vector<1xf32>
    %36 = vector.shape_cast %35 : vector<1xf32> to vector<1x1x1x1xf32>
    %37 = vector.extract %36[0, 0, 0, 0] : f32 from vector<1x1x1x1xf32>
    %cst_17 = arith.constant 1.600000e+01 : f32
    %38 = arith.divf %37, %cst_17 : f32
    %cst_18 = arith.constant 2.000000e+00 : f32
    %39 = arith.mulf %cst_18, %38 : f32
    %40 = arith.addf %24, %39 : f32
    %41 = vector.extract_strided_slice %4 {offsets = [0, 0, 64], sizes = [2, 8, 32], strides = [1, 1, 1]} : vector<2x8x128xf32> to vector<2x8x32xf32>
    %42 = vector.extract_strided_slice %5 {offsets = [0, 0, 64], sizes = [2, 8, 32], strides = [1, 1, 1]} : vector<2x8x128xf32> to vector<2x8x32xf32>
    %cst_19 = arith.constant 1.000000e+00 : f32
    %43 = vector.broadcast %cst_19 : f32 to vector<2x8x32xf32>
    %44 = arith.cmpf olt, %41, %43 : vector<2x8x32xf32>
    %cst_20 = arith.constant 5.000000e-01 : f32
    %45 = vector.broadcast %cst_20 : f32 to vector<2x8x32xf32>
    %46 = arith.mulf %45, %42 : vector<2x8x32xf32>
    %cst_21 = arith.constant 5.000000e-01 : f32
    %47 = vector.broadcast %cst_21 : f32 to vector<2x8x32xf32>
    %48 = arith.subf %41, %47 : vector<2x8x32xf32>
    %49 = arith.select %44, %46, %48 : vector<2x8x32xi1>, vector<2x8x32xf32>
    %cst_22 = arith.constant dense<0.000000e+00> : vector<2x8xf32>
    %50 = vector.multi_reduction <add>, %49, %cst_22 [2] : vector<2x8x32xf32> to vector<2x8xf32>
    %51 = vector.shape_cast %50 : vector<2x8xf32> to vector<2x8x1xf32>
    %cst_23 = arith.constant 3.125000e-02 : f32
    %52 = vector.broadcast %cst_23 : f32 to vector<2x8x1xf32>
    %53 = arith.mulf %51, %52 : vector<2x8x1xf32>
    %54 = vector.extract_strided_slice %2 {offsets = [0, 0, 2], sizes = [2, 8, 1], strides = [1, 1, 1]} : vector<2x8x4xf32> to vector<2x8x1xf32>
    %55 = vector.extract_strided_slice %8 {offsets = [0, 0, 2], sizes = [2, 8, 1], strides = [1, 1, 1]} : vector<2x8x4xf32> to vector<2x8x1xf32>
    %56 = arith.mulf %55, %53 : vector<2x8x1xf32>
    %57 = arith.addf %56, %54 : vector<2x8x1xf32>
    %58 = vector.shape_cast %57 : vector<2x8x1xf32> to vector<1x2x8x1xf32>
    %cst_24 = arith.constant dense<0.000000e+00> : vector<1xf32>
    %59 = vector.multi_reduction <add>, %58, %cst_24 [1, 2, 3] : vector<1x2x8x1xf32> to vector<1xf32>
    %60 = vector.shape_cast %59 : vector<1xf32> to vector<1x1x1x1xf32>
    %61 = vector.extract %60[0, 0, 0, 0] : f32 from vector<1x1x1x1xf32>
    %cst_25 = arith.constant 1.600000e+01 : f32
    %62 = arith.divf %61, %cst_25 : f32
    %cst_26 = arith.constant 1.500000e+00 : f32
    %63 = arith.mulf %cst_26, %62 : f32
    %64 = arith.addf %40, %63 : f32
    %65 = vector.extract_strided_slice %0 {offsets = [0, 0, 96], sizes = [2, 8, 32], strides = [1, 1, 1]} : vector<2x8x128xf32> to vector<2x8x32xf32>
    %66 = vector.extract_strided_slice %1 {offsets = [0, 0, 96], sizes = [2, 8, 32], strides = [1, 1, 1]} : vector<2x8x128xf32> to vector<2x8x32xf32>
    %cst_27 = arith.constant dense<0xFF800000> : vector<2x8xf32>
    %67 = vector.multi_reduction <maximumf>, %65, %cst_27 [2] : vector<2x8x32xf32> to vector<2x8xf32>
    %68 = vector.shape_cast %67 : vector<2x8xf32> to vector<2x8x1xf32>
    %69 = vector.broadcast %68 : vector<2x8x1xf32> to vector<2x8x32xf32>
    %70 = arith.subf %65, %69 : vector<2x8x32xf32>
    %71 = math.exp %70 : vector<2x8x32xf32>
    %cst_28 = arith.constant dense<0.000000e+00> : vector<2x8xf32>
    %72 = vector.multi_reduction <add>, %71, %cst_28 [2] : vector<2x8x32xf32> to vector<2x8xf32>
    %73 = vector.shape_cast %72 : vector<2x8xf32> to vector<2x8x1xf32>
    %74 = math.log %73 : vector<2x8x1xf32>
    %75 = arith.addf %74, %68 : vector<2x8x1xf32>
    %76 = arith.mulf %65, %66 : vector<2x8x32xf32>
    %cst_29 = arith.constant dense<0.000000e+00> : vector<2x8xf32>
    %77 = vector.multi_reduction <add>, %76, %cst_29 [2] : vector<2x8x32xf32> to vector<2x8xf32>
    %78 = vector.shape_cast %77 : vector<2x8xf32> to vector<2x8x1xf32>
    %79 = arith.subf %75, %78 : vector<2x8x1xf32>
    %80 = vector.extract_strided_slice %2 {offsets = [0, 0, 3], sizes = [2, 8, 1], strides = [1, 1, 1]} : vector<2x8x4xf32> to vector<2x8x1xf32>
    %81 = vector.extract_strided_slice %8 {offsets = [0, 0, 3], sizes = [2, 8, 1], strides = [1, 1, 1]} : vector<2x8x4xf32> to vector<2x8x1xf32>
    %82 = arith.mulf %81, %79 : vector<2x8x1xf32>
    %83 = arith.addf %82, %80 : vector<2x8x1xf32>
    %84 = vector.shape_cast %83 : vector<2x8x1xf32> to vector<1x2x8x1xf32>
    %cst_30 = arith.constant dense<0.000000e+00> : vector<1xf32>
    %85 = vector.multi_reduction <add>, %84, %cst_30 [1, 2, 3] : vector<1x2x8x1xf32> to vector<1xf32>
    %86 = vector.shape_cast %85 : vector<1xf32> to vector<1x1x1x1xf32>
    %87 = vector.extract %86[0, 0, 0, 0] : f32 from vector<1x1x1x1xf32>
    %cst_31 = arith.constant 1.600000e+01 : f32
    %88 = arith.divf %87, %cst_31 : f32
    %cst_32 = arith.constant 3.000000e-01 : f32
    %89 = arith.mulf %cst_32, %88 : f32
    %90 = arith.addf %64, %89 : f32
    %91 = vector.extract_strided_slice %0 {offsets = [0, 1, 0], sizes = [2, 7, 128], strides = [1, 1, 1]} : vector<2x8x128xf32> to vector<2x7x128xf32>
    %92 = vector.extract_strided_slice %0 {offsets = [0, 0, 0], sizes = [2, 7, 128], strides = [1, 1, 1]} : vector<2x8x128xf32> to vector<2x7x128xf32>
    %93 = arith.subf %91, %92 : vector<2x7x128xf32>
    %94 = arith.mulf %93, %93 : vector<2x7x128xf32>
    %95 = vector.extract_strided_slice %94 {offsets = [0, 0, 0], sizes = [2, 7, 32], strides = [1, 1, 1]} : vector<2x7x128xf32> to vector<2x7x32xf32>
    %cst_33 = arith.constant dense<0.000000e+00> : vector<2x7xf32>
    %96 = vector.multi_reduction <add>, %95, %cst_33 [2] : vector<2x7x32xf32> to vector<2x7xf32>
    %97 = vector.shape_cast %96 : vector<2x7xf32> to vector<2x7x1xf32>
    %98 = vector.extract_strided_slice %94 {offsets = [0, 0, 32], sizes = [2, 7, 32], strides = [1, 1, 1]} : vector<2x7x128xf32> to vector<2x7x32xf32>
    %cst_34 = arith.constant dense<0.000000e+00> : vector<2x7xf32>
    %99 = vector.multi_reduction <add>, %98, %cst_34 [2] : vector<2x7x32xf32> to vector<2x7xf32>
    %100 = vector.shape_cast %99 : vector<2x7xf32> to vector<2x7x1xf32>
    %101 = vector.extract_strided_slice %94 {offsets = [0, 0, 64], sizes = [2, 7, 32], strides = [1, 1, 1]} : vector<2x7x128xf32> to vector<2x7x32xf32>
    %cst_35 = arith.constant dense<0.000000e+00> : vector<2x7xf32>
    %102 = vector.multi_reduction <add>, %101, %cst_35 [2] : vector<2x7x32xf32> to vector<2x7xf32>
    %103 = vector.shape_cast %102 : vector<2x7xf32> to vector<2x7x1xf32>
    %104 = vector.extract_strided_slice %94 {offsets = [0, 0, 96], sizes = [2, 7, 32], strides = [1, 1, 1]} : vector<2x7x128xf32> to vector<2x7x32xf32>
    %cst_36 = arith.constant dense<0.000000e+00> : vector<2x7xf32>
    %105 = vector.multi_reduction <add>, %104, %cst_36 [2] : vector<2x7x32xf32> to vector<2x7xf32>
    %106 = vector.shape_cast %105 : vector<2x7xf32> to vector<2x7x1xf32>
    %107 = tpu.concatenate %97, %100, %103, %106 in 2 : vector<2x7x1xf32>, vector<2x7x1xf32>, vector<2x7x1xf32>, vector<2x7x1xf32> -> vector<2x7x4xf32>
    %108 = math.sqrt %107 : vector<2x7x4xf32>
    %109 = vector.shape_cast %108 : vector<2x7x4xf32> to vector<1x2x7x4xf32>
    %cst_37 = arith.constant dense<0.000000e+00> : vector<1xf32>
    %110 = vector.multi_reduction <add>, %109, %cst_37 [1, 2, 3] : vector<1x2x7x4xf32> to vector<1xf32>
    %111 = vector.shape_cast %110 : vector<1xf32> to vector<1x1x1x1xf32>
    %112 = vector.extract %111[0, 0, 0, 0] : f32 from vector<1x1x1x1xf32>
    %cst_38 = arith.constant 5.600000e+01 : f32
    %113 = arith.divf %112, %cst_38 : f32
    %cst_39 = arith.constant 1.000000e-01 : f32
    %114 = arith.mulf %cst_39, %113 : f32
    %115 = arith.addf %90, %114 : f32
    %116 = math.absf %2 : vector<2x8x4xf32>
    %117 = vector.shape_cast %116 : vector<2x8x4xf32> to vector<1x2x8x4xf32>
    %cst_40 = arith.constant dense<0.000000e+00> : vector<1xf32>
    %118 = vector.multi_reduction <add>, %117, %cst_40 [1, 2, 3] : vector<1x2x8x4xf32> to vector<1xf32>
    %119 = vector.shape_cast %118 : vector<1xf32> to vector<1x1x1x1xf32>
    %120 = vector.extract %119[0, 0, 0, 0] : f32 from vector<1x1x1x1xf32>
    %cst_41 = arith.constant 6.400000e+01 : f32
    %121 = arith.divf %120, %cst_41 : f32
    %cst_42 = arith.constant 4.000000e+00 : f32
    %122 = arith.mulf %cst_42, %121 : f32
    %cst_43 = arith.constant 0.00999999977 : f32
    %123 = arith.mulf %cst_43, %122 : f32
    %124 = arith.addf %115, %123 : f32
    %125 = arith.mulf %0, %0 : vector<2x8x128xf32>
    %126 = tpu.iota {dimensions = array<i32: 2>} : vector<2x8x128xi32>
    %127 = vector.extract_strided_slice %125 {offsets = [0, 0, 0], sizes = [2, 8, 32], strides = [1, 1, 1]} : vector<2x8x128xf32> to vector<2x8x32xf32>
    %cst_44 = arith.constant dense<0.000000e+00> : vector<2x8xf32>
    %128 = vector.multi_reduction <add>, %127, %cst_44 [2] : vector<2x8x32xf32> to vector<2x8xf32>
    %129 = vector.shape_cast %128 : vector<2x8xf32> to vector<2x8x1xf32>
    %130 = vector.extract_strided_slice %125 {offsets = [0, 0, 32], sizes = [2, 8, 32], strides = [1, 1, 1]} : vector<2x8x128xf32> to vector<2x8x32xf32>
    %cst_45 = arith.constant dense<0.000000e+00> : vector<2x8xf32>
    %131 = vector.multi_reduction <add>, %130, %cst_45 [2] : vector<2x8x32xf32> to vector<2x8xf32>
    %132 = vector.shape_cast %131 : vector<2x8xf32> to vector<2x8x1xf32>
    %133 = vector.extract_strided_slice %125 {offsets = [0, 0, 64], sizes = [2, 8, 32], strides = [1, 1, 1]} : vector<2x8x128xf32> to vector<2x8x32xf32>
    %cst_46 = arith.constant dense<0.000000e+00> : vector<2x8xf32>
    %134 = vector.multi_reduction <add>, %133, %cst_46 [2] : vector<2x8x32xf32> to vector<2x8xf32>
    %135 = vector.shape_cast %134 : vector<2x8xf32> to vector<2x8x1xf32>
    %136 = vector.extract_strided_slice %125 {offsets = [0, 0, 96], sizes = [2, 8, 32], strides = [1, 1, 1]} : vector<2x8x128xf32> to vector<2x8x32xf32>
    %cst_47 = arith.constant dense<0.000000e+00> : vector<2x8xf32>
    %137 = vector.multi_reduction <add>, %136, %cst_47 [2] : vector<2x8x32xf32> to vector<2x8xf32>
    %138 = vector.shape_cast %137 : vector<2x8xf32> to vector<2x8x1xf32>
    %139 = tpu.concatenate %129, %132, %135, %138 in 2 : vector<2x8x1xf32>, vector<2x8x1xf32>, vector<2x8x1xf32>, vector<2x8x1xf32> -> vector<2x8x4xf32>
    %140 = math.sqrt %139 : vector<2x8x4xf32>
    %cst_48 = arith.constant 9.99999996E-13 : f32
    %141 = vector.broadcast %cst_48 : f32 to vector<2x8x4xf32>
    %142 = arith.maximumf %140, %141 : vector<2x8x4xf32>
    %cst_49 = arith.constant 1.000000e+00 : f32
    %143 = vector.broadcast %cst_49 : f32 to vector<2x8x4xf32>
    %144 = arith.divf %143, %142 : vector<2x8x4xf32>
    %145 = vector.extract_strided_slice %144 {offsets = [0, 0, 0], sizes = [2, 8, 1], strides = [1, 1, 1]} : vector<2x8x4xf32> to vector<2x8x1xf32>
    %c32_i32 = arith.constant 32 : i32
    %146 = vector.broadcast %c32_i32 : i32 to vector<2x8x128xi32>
    %147 = arith.cmpi sge, %126, %146 : vector<2x8x128xi32>
    %148 = vector.extract_strided_slice %144 {offsets = [0, 0, 1], sizes = [2, 8, 1], strides = [1, 1, 1]} : vector<2x8x4xf32> to vector<2x8x1xf32>
    %149 = vector.shape_cast %148 : vector<2x8x1xf32> to vector<2x8x1xf32>
    %150 = vector.broadcast %149 : vector<2x8x1xf32> to vector<2x8x128xf32>
    %151 = vector.shape_cast %145 : vector<2x8x1xf32> to vector<2x8x1xf32>
    %152 = vector.broadcast %151 : vector<2x8x1xf32> to vector<2x8x128xf32>
    %153 = arith.select %147, %150, %152 : vector<2x8x128xi1>, vector<2x8x128xf32>
    %c64_i32 = arith.constant 64 : i32
    %154 = vector.broadcast %c64_i32 : i32 to vector<2x8x128xi32>
    %155 = arith.cmpi sge, %126, %154 : vector<2x8x128xi32>
    %156 = vector.extract_strided_slice %144 {offsets = [0, 0, 2], sizes = [2, 8, 1], strides = [1, 1, 1]} : vector<2x8x4xf32> to vector<2x8x1xf32>
    %157 = vector.shape_cast %156 : vector<2x8x1xf32> to vector<2x8x1xf32>
    %158 = vector.broadcast %157 : vector<2x8x1xf32> to vector<2x8x128xf32>
    %159 = arith.select %155, %158, %153 : vector<2x8x128xi1>, vector<2x8x128xf32>
    %c96_i32 = arith.constant 96 : i32
    %160 = vector.broadcast %c96_i32 : i32 to vector<2x8x128xi32>
    %161 = arith.cmpi sge, %126, %160 : vector<2x8x128xi32>
    %162 = vector.extract_strided_slice %144 {offsets = [0, 0, 3], sizes = [2, 8, 1], strides = [1, 1, 1]} : vector<2x8x4xf32> to vector<2x8x1xf32>
    %163 = vector.shape_cast %162 : vector<2x8x1xf32> to vector<2x8x1xf32>
    %164 = vector.broadcast %163 : vector<2x8x1xf32> to vector<2x8x128xf32>
    %165 = arith.select %161, %164, %159 : vector<2x8x128xi1>, vector<2x8x128xf32>
    %166 = arith.mulf %0, %165 : vector<2x8x128xf32>
    %167 = vector.shape_cast %166 : vector<2x8x128xf32> to vector<16x128xf32>
    %168 = vector.extract_strided_slice %167 {offsets = [0, 0], sizes = [16, 32], strides = [1, 1]} : vector<16x128xf32> to vector<16x32xf32>
    %169 = vector.extract_strided_slice %167 {offsets = [0, 32], sizes = [16, 32], strides = [1, 1]} : vector<16x128xf32> to vector<16x32xf32>
    %170 = vector.extract_strided_slice %167 {offsets = [0, 64], sizes = [16, 32], strides = [1, 1]} : vector<16x128xf32> to vector<16x32xf32>
    %171 = vector.extract_strided_slice %167 {offsets = [0, 96], sizes = [16, 32], strides = [1, 1]} : vector<16x128xf32> to vector<16x32xf32>
    %172 = tpu.concatenate %168, %169, %170, %171 in 0 : vector<16x32xf32>, vector<16x32xf32>, vector<16x32xf32>, vector<16x32xf32> -> vector<64x32xf32>
    %cst_50 = arith.constant dense<0.000000e+00> : vector<64x64xf32>
    %173 = tpu.matmul %172, %172, %cst_50 {dimension_numbers = #tpu.dot_dimension_numbers<[1], [1], [0], [0], [0, 0, 1, 0], [], []>} : vector<64x32xf32>, vector<64x32xf32>, vector<64x64xf32> -> vector<64x64xf32>
    %cst_51 = arith.constant 14.2857141 : f32
    %174 = vector.broadcast %cst_51 : f32 to vector<64x64xf32>
    %175 = arith.mulf %173, %174 : vector<64x64xf32>
    %176 = tpu.iota {dimensions = array<i32: 0>} : vector<16x16xi32>
    %177 = tpu.iota {dimensions = array<i32: 1>} : vector<16x16xi32>
    %178 = arith.cmpi eq, %176, %177 : vector<16x16xi32>
    %179 = vector.extract_strided_slice %175 {offsets = [0, 16], sizes = [16, 16], strides = [1, 1]} : vector<64x64xf32> to vector<16x16xf32>
    %cst_52 = arith.constant dense<0xFF800000> : vector<16xf32>
    %180 = vector.multi_reduction <maximumf>, %179, %cst_52 [1] : vector<16x16xf32> to vector<16xf32>
    %181 = vector.shape_cast %180 : vector<16xf32> to vector<16x1xf32>
    %182 = vector.broadcast %181 : vector<16x1xf32> to vector<16x16xf32>
    %183 = arith.subf %179, %182 : vector<16x16xf32>
    %184 = math.exp %183 : vector<16x16xf32>
    %cst_53 = arith.constant dense<0.000000e+00> : vector<16xf32>
    %185 = vector.multi_reduction <add>, %184, %cst_53 [1] : vector<16x16xf32> to vector<16xf32>
    %186 = vector.shape_cast %185 : vector<16xf32> to vector<16x1xf32>
    %187 = math.log %186 : vector<16x1xf32>
    %188 = arith.addf %187, %181 : vector<16x1xf32>
    %cst_54 = arith.constant 0.000000e+00 : f32
    %189 = vector.broadcast %cst_54 : f32 to vector<16x16xf32>
    %190 = arith.select %178, %179, %189 : vector<16x16xi1>, vector<16x16xf32>
    %cst_55 = arith.constant dense<0.000000e+00> : vector<16xf32>
    %191 = vector.multi_reduction <add>, %190, %cst_55 [1] : vector<16x16xf32> to vector<16xf32>
    %192 = vector.shape_cast %191 : vector<16xf32> to vector<16x1xf32>
    %193 = arith.subf %188, %192 : vector<16x1xf32>
    %194 = vector.shape_cast %193 : vector<16x1xf32> to vector<1x16x1xf32>
    %cst_56 = arith.constant dense<0.000000e+00> : vector<1xf32>
    %195 = vector.multi_reduction <add>, %194, %cst_56 [1, 2] : vector<1x16x1xf32> to vector<1xf32>
    %196 = vector.shape_cast %195 : vector<1xf32> to vector<1x1x1xf32>
    %197 = vector.extract %196[0, 0, 0] : f32 from vector<1x1x1xf32>
    %cst_57 = arith.constant 1.600000e+01 : f32
    %198 = arith.divf %197, %cst_57 : f32
    %cst_58 = arith.constant 0.000000e+00 : f32
    %199 = arith.addf %cst_58, %198 : f32
    %200 = vector.extract_strided_slice %175 {offsets = [0, 32], sizes = [16, 16], strides = [1, 1]} : vector<64x64xf32> to vector<16x16xf32>
    %cst_59 = arith.constant dense<0xFF800000> : vector<16xf32>
    %201 = vector.multi_reduction <maximumf>, %200, %cst_59 [1] : vector<16x16xf32> to vector<16xf32>
    %202 = vector.shape_cast %201 : vector<16xf32> to vector<16x1xf32>
    %203 = vector.broadcast %202 : vector<16x1xf32> to vector<16x16xf32>
    %204 = arith.subf %200, %203 : vector<16x16xf32>
    %205 = math.exp %204 : vector<16x16xf32>
    %cst_60 = arith.constant dense<0.000000e+00> : vector<16xf32>
    %206 = vector.multi_reduction <add>, %205, %cst_60 [1] : vector<16x16xf32> to vector<16xf32>
    %207 = vector.shape_cast %206 : vector<16xf32> to vector<16x1xf32>
    %208 = math.log %207 : vector<16x1xf32>
    %209 = arith.addf %208, %202 : vector<16x1xf32>
    %cst_61 = arith.constant 0.000000e+00 : f32
    %210 = vector.broadcast %cst_61 : f32 to vector<16x16xf32>
    %211 = arith.select %178, %200, %210 : vector<16x16xi1>, vector<16x16xf32>
    %cst_62 = arith.constant dense<0.000000e+00> : vector<16xf32>
    %212 = vector.multi_reduction <add>, %211, %cst_62 [1] : vector<16x16xf32> to vector<16xf32>
    %213 = vector.shape_cast %212 : vector<16xf32> to vector<16x1xf32>
    %214 = arith.subf %209, %213 : vector<16x1xf32>
    %215 = vector.shape_cast %214 : vector<16x1xf32> to vector<1x16x1xf32>
    %cst_63 = arith.constant dense<0.000000e+00> : vector<1xf32>
    %216 = vector.multi_reduction <add>, %215, %cst_63 [1, 2] : vector<1x16x1xf32> to vector<1xf32>
    %217 = vector.shape_cast %216 : vector<1xf32> to vector<1x1x1xf32>
    %218 = vector.extract %217[0, 0, 0] : f32 from vector<1x1x1xf32>
    %cst_64 = arith.constant 1.600000e+01 : f32
    %219 = arith.divf %218, %cst_64 : f32
    %220 = arith.addf %199, %219 : f32
    %221 = vector.extract_strided_slice %175 {offsets = [0, 48], sizes = [16, 16], strides = [1, 1]} : vector<64x64xf32> to vector<16x16xf32>
    %cst_65 = arith.constant dense<0xFF800000> : vector<16xf32>
    %222 = vector.multi_reduction <maximumf>, %221, %cst_65 [1] : vector<16x16xf32> to vector<16xf32>
    %223 = vector.shape_cast %222 : vector<16xf32> to vector<16x1xf32>
    %224 = vector.broadcast %223 : vector<16x1xf32> to vector<16x16xf32>
    %225 = arith.subf %221, %224 : vector<16x16xf32>
    %226 = math.exp %225 : vector<16x16xf32>
    %cst_66 = arith.constant dense<0.000000e+00> : vector<16xf32>
    %227 = vector.multi_reduction <add>, %226, %cst_66 [1] : vector<16x16xf32> to vector<16xf32>
    %228 = vector.shape_cast %227 : vector<16xf32> to vector<16x1xf32>
    %229 = math.log %228 : vector<16x1xf32>
    %230 = arith.addf %229, %223 : vector<16x1xf32>
    %cst_67 = arith.constant 0.000000e+00 : f32
    %231 = vector.broadcast %cst_67 : f32 to vector<16x16xf32>
    %232 = arith.select %178, %221, %231 : vector<16x16xi1>, vector<16x16xf32>
    %cst_68 = arith.constant dense<0.000000e+00> : vector<16xf32>
    %233 = vector.multi_reduction <add>, %232, %cst_68 [1] : vector<16x16xf32> to vector<16xf32>
    %234 = vector.shape_cast %233 : vector<16xf32> to vector<16x1xf32>
    %235 = arith.subf %230, %234 : vector<16x1xf32>
    %236 = vector.shape_cast %235 : vector<16x1xf32> to vector<1x16x1xf32>
    %cst_69 = arith.constant dense<0.000000e+00> : vector<1xf32>
    %237 = vector.multi_reduction <add>, %236, %cst_69 [1, 2] : vector<1x16x1xf32> to vector<1xf32>
    %238 = vector.shape_cast %237 : vector<1xf32> to vector<1x1x1xf32>
    %239 = vector.extract %238[0, 0, 0] : f32 from vector<1x1x1xf32>
    %cst_70 = arith.constant 1.600000e+01 : f32
    %240 = arith.divf %239, %cst_70 : f32
    %241 = arith.addf %220, %240 : f32
    %242 = vector.extract_strided_slice %175 {offsets = [16, 32], sizes = [16, 16], strides = [1, 1]} : vector<64x64xf32> to vector<16x16xf32>
    %cst_71 = arith.constant dense<0xFF800000> : vector<16xf32>
    %243 = vector.multi_reduction <maximumf>, %242, %cst_71 [1] : vector<16x16xf32> to vector<16xf32>
    %244 = vector.shape_cast %243 : vector<16xf32> to vector<16x1xf32>
    %245 = vector.broadcast %244 : vector<16x1xf32> to vector<16x16xf32>
    %246 = arith.subf %242, %245 : vector<16x16xf32>
    %247 = math.exp %246 : vector<16x16xf32>
    %cst_72 = arith.constant dense<0.000000e+00> : vector<16xf32>
    %248 = vector.multi_reduction <add>, %247, %cst_72 [1] : vector<16x16xf32> to vector<16xf32>
    %249 = vector.shape_cast %248 : vector<16xf32> to vector<16x1xf32>
    %250 = math.log %249 : vector<16x1xf32>
    %251 = arith.addf %250, %244 : vector<16x1xf32>
    %cst_73 = arith.constant 0.000000e+00 : f32
    %252 = vector.broadcast %cst_73 : f32 to vector<16x16xf32>
    %253 = arith.select %178, %242, %252 : vector<16x16xi1>, vector<16x16xf32>
    %cst_74 = arith.constant dense<0.000000e+00> : vector<16xf32>
    %254 = vector.multi_reduction <add>, %253, %cst_74 [1] : vector<16x16xf32> to vector<16xf32>
    %255 = vector.shape_cast %254 : vector<16xf32> to vector<16x1xf32>
    %256 = arith.subf %251, %255 : vector<16x1xf32>
    %257 = vector.shape_cast %256 : vector<16x1xf32> to vector<1x16x1xf32>
    %cst_75 = arith.constant dense<0.000000e+00> : vector<1xf32>
    %258 = vector.multi_reduction <add>, %257, %cst_75 [1, 2] : vector<1x16x1xf32> to vector<1xf32>
    %259 = vector.shape_cast %258 : vector<1xf32> to vector<1x1x1xf32>
    %260 = vector.extract %259[0, 0, 0] : f32 from vector<1x1x1xf32>
    %cst_76 = arith.constant 1.600000e+01 : f32
    %261 = arith.divf %260, %cst_76 : f32
    %262 = arith.addf %241, %261 : f32
    %263 = vector.extract_strided_slice %175 {offsets = [16, 48], sizes = [16, 16], strides = [1, 1]} : vector<64x64xf32> to vector<16x16xf32>
    %cst_77 = arith.constant dense<0xFF800000> : vector<16xf32>
    %264 = vector.multi_reduction <maximumf>, %263, %cst_77 [1] : vector<16x16xf32> to vector<16xf32>
    %265 = vector.shape_cast %264 : vector<16xf32> to vector<16x1xf32>
    %266 = vector.broadcast %265 : vector<16x1xf32> to vector<16x16xf32>
    %267 = arith.subf %263, %266 : vector<16x16xf32>
    %268 = math.exp %267 : vector<16x16xf32>
    %cst_78 = arith.constant dense<0.000000e+00> : vector<16xf32>
    %269 = vector.multi_reduction <add>, %268, %cst_78 [1] : vector<16x16xf32> to vector<16xf32>
    %270 = vector.shape_cast %269 : vector<16xf32> to vector<16x1xf32>
    %271 = math.log %270 : vector<16x1xf32>
    %272 = arith.addf %271, %265 : vector<16x1xf32>
    %cst_79 = arith.constant 0.000000e+00 : f32
    %273 = vector.broadcast %cst_79 : f32 to vector<16x16xf32>
    %274 = arith.select %178, %263, %273 : vector<16x16xi1>, vector<16x16xf32>
    %cst_80 = arith.constant dense<0.000000e+00> : vector<16xf32>
    %275 = vector.multi_reduction <add>, %274, %cst_80 [1] : vector<16x16xf32> to vector<16xf32>
    %276 = vector.shape_cast %275 : vector<16xf32> to vector<16x1xf32>
    %277 = arith.subf %272, %276 : vector<16x1xf32>
    %278 = vector.shape_cast %277 : vector<16x1xf32> to vector<1x16x1xf32>
    %cst_81 = arith.constant dense<0.000000e+00> : vector<1xf32>
    %279 = vector.multi_reduction <add>, %278, %cst_81 [1, 2] : vector<1x16x1xf32> to vector<1xf32>
    %280 = vector.shape_cast %279 : vector<1xf32> to vector<1x1x1xf32>
    %281 = vector.extract %280[0, 0, 0] : f32 from vector<1x1x1xf32>
    %cst_82 = arith.constant 1.600000e+01 : f32
    %282 = arith.divf %281, %cst_82 : f32
    %283 = arith.addf %262, %282 : f32
    %284 = vector.extract_strided_slice %175 {offsets = [32, 48], sizes = [16, 16], strides = [1, 1]} : vector<64x64xf32> to vector<16x16xf32>
    %cst_83 = arith.constant dense<0xFF800000> : vector<16xf32>
    %285 = vector.multi_reduction <maximumf>, %284, %cst_83 [1] : vector<16x16xf32> to vector<16xf32>
    %286 = vector.shape_cast %285 : vector<16xf32> to vector<16x1xf32>
    %287 = vector.broadcast %286 : vector<16x1xf32> to vector<16x16xf32>
    %288 = arith.subf %284, %287 : vector<16x16xf32>
    %289 = math.exp %288 : vector<16x16xf32>
    %cst_84 = arith.constant dense<0.000000e+00> : vector<16xf32>
    %290 = vector.multi_reduction <add>, %289, %cst_84 [1] : vector<16x16xf32> to vector<16xf32>
    %291 = vector.shape_cast %290 : vector<16xf32> to vector<16x1xf32>
    %292 = math.log %291 : vector<16x1xf32>
    %293 = arith.addf %292, %286 : vector<16x1xf32>
    %cst_85 = arith.constant 0.000000e+00 : f32
    %294 = vector.broadcast %cst_85 : f32 to vector<16x16xf32>
    %295 = arith.select %178, %284, %294 : vector<16x16xi1>, vector<16x16xf32>
    %cst_86 = arith.constant dense<0.000000e+00> : vector<16xf32>
    %296 = vector.multi_reduction <add>, %295, %cst_86 [1] : vector<16x16xf32> to vector<16xf32>
    %297 = vector.shape_cast %296 : vector<16xf32> to vector<16x1xf32>
    %298 = arith.subf %293, %297 : vector<16x1xf32>
    %299 = vector.shape_cast %298 : vector<16x1xf32> to vector<1x16x1xf32>
    %cst_87 = arith.constant dense<0.000000e+00> : vector<1xf32>
    %300 = vector.multi_reduction <add>, %299, %cst_87 [1, 2] : vector<1x16x1xf32> to vector<1xf32>
    %301 = vector.shape_cast %300 : vector<1xf32> to vector<1x1x1xf32>
    %302 = vector.extract %301[0, 0, 0] : f32 from vector<1x1x1xf32>
    %cst_88 = arith.constant 1.600000e+01 : f32
    %303 = arith.divf %302, %cst_88 : f32
    %304 = arith.addf %283, %303 : f32
    %cst_89 = arith.constant 6.000000e+00 : f32
    %305 = arith.divf %304, %cst_89 : f32
    %cst_90 = arith.constant 1.000000e-01 : f32
    %306 = arith.mulf %cst_90, %305 : f32
    %307 = arith.addf %124, %306 : f32
    %c0_91 = arith.constant 0 : index
    %c0_92 = arith.constant 0 : index
    %308 = memref.load %arg3[%c0_91, %c0_92] : memref<1x1xf32, #tpu.memory_space<smem>>
    memref.store %307, %arg3[%c0_91, %c0_92] : memref<1x1xf32, #tpu.memory_space<smem>>
    return
  }
}

</mosaic_0001>

<llo_original>
// kernel: tpu_custom_call.1
$region0: #{tpu_custom_call.1}
  #allocation0 [shape = 'u32[]', space=smem, size = 0x4, offset = 0x4, fixed_abs, tag = 'smem constant byte address 0x4 - core index']
  #allocation1 [shape = 'u32[72,128]{1,0:T(1,128)}', space=vmem, size = 0x9000, scoped, tag = 'internal scratch']
  %s0 = inlined_call_operand.vmem [shape: f32[2,8,128], index: 0, kind: input, shape index: {}]
  %s1 = inlined_call_operand.hbm [shape: f32[2,8,128], index: 1, kind: input, shape index: {}]
  %s2 = inlined_call_operand.vmem [shape: f32[2,8,4], index: 2, kind: input, shape index: {}]
  %s3 = inlined_call_operand.hbm [shape: f32[1,1], index: 3, kind: output, shape index: {}]
  %s4 = sld [smem:[#allocation0]]
  $region26: #{tpu_custom_call.1} parent=0
    _
  %s6 = ssub.s32 1, %s4
  %s7 = scalar_select 0, %s6, %s4
  $region1: #{tpu_custom_call.1} parent=0
    #allocation2 [shape = 'u8[8192]{0}', space=vmem, size = 0x2000, scoped, tag = 'input window, operand 1, single buffered']
    #allocation3 [shape = 's32[1]{0}', space=sflag, size = 0x4, scoped, tag = 'scoped memory for tpu_custom_call.1']
    #allocation4 [shape = 's32[1]{0}', space=sflag, size = 0x4, scoped, tag = 'scoped memory for tpu_custom_call.1']
    #allocation5 [shape = 'u8[512]{0}', space=smem, size = 0x200, scoped, tag = 'output window, operand 0, single buffered']
    %8 = vsyncpa [#allocation3], 0
    %9 = vsyncpa [#allocation4], 0
    // Predicated region
    $region2: #{tpu_custom_call.1} parent=1 // pred_check
      _
    $region3: #{tpu_custom_call.1} parent=1 // pred_check_branch
      %11 = sbr.rel (0) target = $region5
    $region4: #{tpu_custom_call.1} parent=1 // pred_region
      _
    $region5: #{tpu_custom_call.1} parent=1 // pred_fallthru
      _
    // Predicated region
    $region6: #{tpu_custom_call.1} parent=1 // pred_check
      _
    $region7: #{tpu_custom_call.1} parent=1 // pred_check_branch
      %13 = sbr.rel (0) target = $region9
    $region8: #{tpu_custom_call.1} parent=1 // pred_region
      %15 = vsyncadd [#allocation3], 0
      %s16 = sshll.u32 %s1, 4
      %s17 = int_to_ptr.hbm [resolvable:$true] %s16
      %s18 = sshll.u32 [#allocation2], 4
      %s19 = int_to_ptr.vmem [resolvable:$true] %s18
      %24 = dma.hbm_to_vmem [thread:$0]  %s17, 256, %s19, [#allocation3], 128, 128, 8
    $region9: #{tpu_custom_call.1} parent=1 // pred_fallthru
      _
    // Predicated region
    $region10: #{tpu_custom_call.1} parent=1 // pred_check
      _
    $region11: #{tpu_custom_call.1} parent=1 // pred_check_branch
      %26 = sbr.rel (0) target = $region13
    $region12: #{tpu_custom_call.1} parent=1 // pred_region
      _
    $region13: #{tpu_custom_call.1} parent=1 // pred_fallthru
      _
    // Predicated region
    $region14: #{tpu_custom_call.1} parent=1 // pred_check
      _
    $region15: #{tpu_custom_call.1} parent=1 // pred_check_branch
      %28 = sbr.rel (0) target = $region17
    $region16: #{tpu_custom_call.1} parent=1 // pred_region
      %30 = dma.done [#allocation3], 256
    $region17: #{tpu_custom_call.1} parent=1 // pred_fallthru
      _
    %v31 = vld [vmem:[%s0] sm:$0xff]
    %v32 = vld [vmem:[%s0 + $0x8] sm:$0xff]
    %v33 = vld [vmem:[#allocation2] sm:$0xff]
    %v34 = vld [vmem:[#allocation2 + $0x8] sm:$0xff]
    %v35 = vld [vmem:[%s2] sm:$0xff]
    %v36 = vld [vmem:[%s2 + $0x8] sm:$0xff]
    %v37 = vsub.f32 %v31, %v33
    %v38 = vsub.f32 %v32, %v34
    %v39 = vand.u32 2147483647, %v37
    %v40 = vand.u32 2147483647, %v38
    %v41 = vmul.f32 %v37, %v37
    %v42 = vmul.f32 %v38, %v38
    %v43 = vsub.f32 0.0, %v35
    %v44 = vsub.f32 0.0, %v36
    %v45 = vmul.f32 %v43, 1.442695
    %v46 = vpow.pop %v45
    %v47 = vmul.f32 %v44, 1.442695
    %v48 = vpow.pop %v47
    %vm49 = vcmask 261120
    %v50 = vsel %vm49, %v39, 0.0
    %51 = vadd.xlane.f32.xlu0 %v50
    %v52 = vpop.xlane.xlu0 %51
    %v53 = vsel %vm49, %v40, 0.0
    %54 = vadd.xlane.f32.xlu0 %v53
    %v55 = vpop.xlane.xlu0 %54
    %v56 = vmul.f32 %v52, 0.03125
    %v57 = vmul.f32 %v55, 0.03125
    %v58 = vmul.f32 %v46, %v56
    %v59 = vmul.f32 %v48, %v57
    %v60 = vadd.f32 %v58, %v35
    %v61 = vadd.f32 %v59, %v36
    %vm62 = vcmask 7168
    %v63 = vsel %vm62, %v60, 0.0
    %v64 = vsel %vm62, %v61, 0.0
    %v65 = vadd.f32 %v63, %v64
    %66 = vadd.xlane.f32.xlu0 %v65
    %v67 = vpop.xlane.xlu0 %66
    %v68 = vrot.slane %v67, 4
    %v69 = vadd.f32 %v67, %v68
    %v70 = vrot.slane %v69, 2
    %v71 = vadd.f32 %v69, %v70
    %v72 = vrot.slane %v71, 1
    %v73 = vadd.f32 %v71, %v72
    %s74 = vtos %v73
    %v75 = vrcp.pop 16.0
    %v76 = vmul.f32 16.0, %v75
    %v77 = vsub.f32 1.0, %v76
    %v78 = vmul.f32 %v75, %v77
    %v79 = vadd.f32 %v75, %v78
    %vm80 = vweird.f32 %v75
    %v81 = vsel %vm80, %v75, %v79
    %s82 = vtos %v81
    %s83 = smul.f32 %s74, %s82
    %s84 = smul.f32 %s83, 0.5
    %s85 = sadd.f32 %s84, 0.0
    %88 = vrot.lane.b32.xlu0 %v41, 96
    %v89 = vpop.permute.xlu0 %88
    %90 = vrot.lane.b32.xlu0 %v42, 96
    %v91 = vpop.permute.xlu0 %90
    %v94 = vsel %vm49, %v89, 0.0
    %95 = vadd.xlane.f32.xlu0 %v94
    %v96 = vpop.xlane.xlu0 %95
    %v97 = vsel %vm49, %v91, 0.0
    %98 = vadd.xlane.f32.xlu0 %v97
    %v99 = vpop.xlane.xlu0 %98
    %v100 = vmul.f32 %v96, 0.03125
    %v101 = vmul.f32 %v99, 0.03125
    %v102 = vmul.f32 %v46, %v100
    %v103 = vmul.f32 %v48, %v101
    %v104 = vadd.f32 %v102, %v35
    %v105 = vadd.f32 %v103, %v36
    %108 = vrot.lane.b32.xlu0 %v104, 127
    %v109 = vpop.permute.xlu0 %108
    %110 = vrot.lane.b32.xlu0 %v105, 127
    %v111 = vpop.permute.xlu0 %110
    %v114 = vsel %vm62, %v109, 0.0
    %v115 = vsel %vm62, %v111, 0.0
    %v116 = vadd.f32 %v114, %v115
    %117 = vadd.xlane.f32.xlu0 %v116
    %v118 = vpop.xlane.xlu0 %117
    %v119 = vrot.slane %v118, 4
    %v120 = vadd.f32 %v118, %v119
    %v121 = vrot.slane %v120, 2
    %v122 = vadd.f32 %v120, %v121
    %v123 = vrot.slane %v122, 1
    %v124 = vadd.f32 %v122, %v123
    %s125 = vtos %v124
    %v126 = vrcp.pop 16.0
    %v127 = vmul.f32 16.0, %v126
    %v128 = vsub.f32 1.0, %v127
    %v129 = vmul.f32 %v126, %v128
    %v130 = vadd.f32 %v126, %v129
    %vm131 = vweird.f32 %v126
    %v132 = vsel %vm131, %v126, %v130
    %s133 = vtos %v132
    %s134 = smul.f32 %s125, %s133
    %s135 = smul.f32 %s134, 2.0
    %s136 = sadd.f32 %s85, %s135
    %vm137 = vcmp.lt.f32.partialorder %v39, 1.0
    %vm138 = vcmp.lt.f32.partialorder %v40, 1.0
    %v139 = vmul.f32 %v41, 0.5
    %v140 = vmul.f32 %v42, 0.5
    %v141 = vsub.f32 %v39, 0.5
    %v142 = vsub.f32 %v40, 0.5
    %v143 = vsel %vm137, %v139, %v141
    %v144 = vsel %vm138, %v140, %v142
    %147 = vrot.lane.b32.xlu0 %v143, 64
    %v148 = vpop.permute.xlu0 %147
    %149 = vrot.lane.b32.xlu0 %v144, 64
    %v150 = vpop.permute.xlu0 %149
    %v153 = vsel %vm49, %v148, 0.0
    %154 = vadd.xlane.f32.xlu0 %v153
    %v155 = vpop.xlane.xlu0 %154
    %v156 = vsel %vm49, %v150, 0.0
    %157 = vadd.xlane.f32.xlu0 %v156
    %v158 = vpop.xlane.xlu0 %157
    %v159 = vmul.f32 %v155, 0.03125
    %v160 = vmul.f32 %v158, 0.03125
    %v161 = vmul.f32 %v46, %v159
    %v162 = vmul.f32 %v48, %v160
    %v163 = vadd.f32 %v161, %v35
    %v164 = vadd.f32 %v162, %v36
    %167 = vrot.lane.b32.xlu0 %v163, 126
    %v168 = vpop.permute.xlu0 %167
    %169 = vrot.lane.b32.xlu0 %v164, 126
    %v170 = vpop.permute.xlu0 %169
    %v173 = vsel %vm62, %v168, 0.0
    %v174 = vsel %vm62, %v170, 0.0
    %v175 = vadd.f32 %v173, %v174
    %176 = vadd.xlane.f32.xlu0 %v175
    %v177 = vpop.xlane.xlu0 %176
    %v178 = vrot.slane %v177, 4
    %v179 = vadd.f32 %v177, %v178
    %v180 = vrot.slane %v179, 2
    %v181 = vadd.f32 %v179, %v180
    %v182 = vrot.slane %v181, 1
    %v183 = vadd.f32 %v181, %v182
    %s184 = vtos %v183
    %v185 = vrcp.pop 16.0
    %v186 = vmul.f32 16.0, %v185
    %v187 = vsub.f32 1.0, %v186
    %v188 = vmul.f32 %v185, %v187
    %v189 = vadd.f32 %v185, %v188
    %vm190 = vweird.f32 %v185
    %v191 = vsel %vm190, %v185, %v189
    %s192 = vtos %v191
    %s193 = smul.f32 %s184, %s192
    %s194 = smul.f32 %s193, 1.5
    %s195 = sadd.f32 %s136, %s194
    %vm196 = vcmask 1048320
    %v197 = vsel %vm196, %v31, -inf
    %198 = vmax.xlane.f32.xlu0 %v197
    %v199 = vpop.xlane.xlu0 %198
    %v200 = vsel %vm196, %v32, -inf
    %201 = vmax.xlane.f32.xlu0 %v200
    %v202 = vpop.xlane.xlu0 %201
    %v203 = vsub.f32 %v31, %v199
    %v204 = vsub.f32 %v32, %v202
    %v205 = vmul.f32 %v203, 1.442695
    %v206 = vpow.pop %v205
    %v207 = vmul.f32 %v204, 1.442695
    %v208 = vpow.pop %v207
    %211 = vrot.lane.b32.xlu0 %v206, 32
    %v212 = vpop.permute.xlu0 %211
    %213 = vrot.lane.b32.xlu0 %v208, 32
    %v214 = vpop.permute.xlu0 %213
    %v217 = vsel %vm49, %v212, 0.0
    %218 = vadd.xlane.f32.xlu0 %v217
    %v219 = vpop.xlane.xlu0 %218
    %v220 = vsel %vm49, %v214, 0.0
    %221 = vadd.xlane.f32.xlu0 %v220
    %v222 = vpop.xlane.xlu0 %221
    %v223 = vlog2.pop %v219
    %v224 = vmul.f32 %v223, 0.6931472
    %v225 = vlog2.pop %v222
    %v226 = vmul.f32 %v225, 0.6931472
    %v227 = vadd.f32 %v224, %v199
    %v228 = vadd.f32 %v226, %v202
    %v229 = vmul.f32 %v31, %v33
    %v230 = vmul.f32 %v32, %v34
    %233 = vrot.lane.b32.xlu0 %v229, 32
    %v234 = vpop.permute.xlu0 %233
    %235 = vrot.lane.b32.xlu0 %v230, 32
    %v236 = vpop.permute.xlu0 %235
    %v239 = vsel %vm49, %v234, 0.0
    %240 = vadd.xlane.f32.xlu0 %v239
    %v241 = vpop.xlane.xlu0 %240
    %v242 = vsel %vm49, %v236, 0.0
    %243 = vadd.xlane.f32.xlu0 %v242
    %v244 = vpop.xlane.xlu0 %243
    %v245 = vsub.f32 %v227, %v241
    %v246 = vsub.f32 %v228, %v244
    %v247 = vmul.f32 %v46, %v245
    %v248 = vmul.f32 %v48, %v246
    %v249 = vadd.f32 %v247, %v35
    %v250 = vadd.f32 %v248, %v36
    %253 = vrot.lane.b32.xlu0 %v249, 125
    %v254 = vpop.permute.xlu0 %253
    %255 = vrot.lane.b32.xlu0 %v250, 125
    %v256 = vpop.permute.xlu0 %255
    %v259 = vsel %vm62, %v254, 0.0
    %v260 = vsel %vm62, %v256, 0.0
    %v261 = vadd.f32 %v259, %v260
    %262 = vadd.xlane.f32.xlu0 %v261
    %v263 = vpop.xlane.xlu0 %262
    %v264 = vrot.slane %v263, 4
    %v265 = vadd.f32 %v263, %v264
    %v266 = vrot.slane %v265, 2
    %v267 = vadd.f32 %v265, %v266
    %v268 = vrot.slane %v267, 1
    %v269 = vadd.f32 %v267, %v268
    %s270 = vtos %v269
    %v271 = vrcp.pop 16.0
    %v272 = vmul.f32 16.0, %v271
    %v273 = vsub.f32 1.0, %v272
    %v274 = vmul.f32 %v271, %v273
    %v275 = vadd.f32 %v271, %v274
    %vm276 = vweird.f32 %v271
    %v277 = vsel %vm276, %v271, %v275
    %s278 = vtos %v277
    %s279 = smul.f32 %s270, %s278
    %s280 = smul.f32 %s279, 0.3
    %s281 = sadd.f32 %s195, %s280
    %v284 = vrot.slane %v31, 7
    %v285 = vrot.slane %v32, 7
    %v288 = vsub.f32 %v31, %v284
    %v289 = vsub.f32 %v32, %v285
    %v290 = vmul.f32 %v288, %v288
    %v291 = vmul.f32 %v289, %v289
    %vm292 = vcmask 261121
    %v293 = vsel %vm292, %v290, 0.0
    %294 = vadd.xlane.f32.xlu0 %v293
    %v295 = vpop.xlane.xlu0 %294
    %v296 = vsel %vm292, %v291, 0.0
    %297 = vadd.xlane.f32.xlu0 %v296
    %v298 = vpop.xlane.xlu0 %297
    %301 = vrot.lane.b32.xlu0 %v290, 96
    %v302 = vpop.permute.xlu0 %301
    %303 = vrot.lane.b32.xlu0 %v291, 96
    %v304 = vpop.permute.xlu0 %303
    %v307 = vsel %vm292, %v302, 0.0
    %308 = vadd.xlane.f32.xlu0 %v307
    %v309 = vpop.xlane.xlu0 %308
    %v310 = vsel %vm292, %v304, 0.0
    %311 = vadd.xlane.f32.xlu0 %v310
    %v312 = vpop.xlane.xlu0 %311
    %313 = vrot.lane.b32.xlu0 %v290, 64
    %v314 = vpop.permute.xlu0 %313
    %315 = vrot.lane.b32.xlu0 %v291, 64
    %v316 = vpop.permute.xlu0 %315
    %v319 = vsel %vm292, %v314, 0.0
    %320 = vadd.xlane.f32.xlu0 %v319
    %v321 = vpop.xlane.xlu0 %320
    %v322 = vsel %vm292, %v316, 0.0
    %323 = vadd.xlane.f32.xlu0 %v322
    %v324 = vpop.xlane.xlu0 %323
    %325 = vrot.lane.b32.xlu0 %v290, 32
    %v326 = vpop.permute.xlu0 %325
    %327 = vrot.lane.b32.xlu0 %v291, 32
    %v328 = vpop.permute.xlu0 %327
    %v331 = vsel %vm292, %v326, 0.0
    %332 = vadd.xlane.f32.xlu0 %v331
    %v333 = vpop.xlane.xlu0 %332
    %v334 = vsel %vm292, %v328, 0.0
    %335 = vadd.xlane.f32.xlu0 %v334
    %v336 = vpop.xlane.xlu0 %335
    %v337 = vsel %vm62, %v295, %v309
    %v338 = vsel %vm62, %v298, %v312
    %vm339 = vcmask 15360
    %v340 = vsel %vm339, %v337, %v321
    %v341 = vsel %vm339, %v338, %v324
    %vm342 = vcmask 23552
    %v343 = vsel %vm342, %v340, %v333
    %v344 = vsel %vm342, %v341, %v336
    %v345 = vrsqrt.pop %v343
    %v346 = vmul.f32 %v345, %v343
    %v347 = vmul.f32 %v346, %v345
    %v348 = vmul.f32 0.5, %v347
    %v349 = vsub.f32 1.5, %v348
    %v350 = vmul.f32 %v345, %v349
    %v351 = vmul.f32 %v343, %v350
    %vm352 = vcmp.eq.f32.partialorder %v343, inf
    %v353 = vsel %vm352, %v343, %v351
    %vm354 = vcmp.eq.f32.partialorder %v343, 0.0
    %v355 = vand.u32 %v343, 2147483648
    %v356 = vsel %vm354, %v355, %v353
    %v357 = vrsqrt.pop %v344
    %v358 = vmul.f32 %v357, %v344
    %v359 = vmul.f32 %v358, %v357
    %v360 = vmul.f32 0.5, %v359
    %v361 = vsub.f32 1.5, %v360
    %v362 = vmul.f32 %v357, %v361
    %v363 = vmul.f32 %v344, %v362
    %vm364 = vcmp.eq.f32.partialorder %v344, inf
    %v365 = vsel %vm364, %v344, %v363
    %vm366 = vcmp.eq.f32.partialorder %v344, 0.0
    %v367 = vand.u32 %v344, 2147483648
    %v368 = vsel %vm366, %v367, %v365
    %v371 = vrot.slane %v356, 1
    %v372 = vrot.slane %v368, 1
    %vm375 = vcmask 30720
    %v376 = vsel %vm375, %v371, 0.0
    %v377 = vsel %vm375, %v372, 0.0
    %v378 = vadd.f32 %v376, %v377
    %379 = vadd.xlane.f32.xlu0 %v378
    %v380 = vpop.xlane.xlu0 %379
    %v381 = vrot.slane %v380, 4
    %v382 = vadd.f32 %v380, %v381
    %v383 = vrot.slane %v382, 2
    %v384 = vadd.f32 %v382, %v383
    %v385 = vrot.slane %v384, 1
    %v386 = vadd.f32 %v384, %v385
    %s387 = vtos %v386
    %v388 = vrcp.pop 56.0
    %v389 = vmul.f32 56.0, %v388
    %v390 = vsub.f32 1.0, %v389
    %v391 = vmul.f32 %v388, %v390
    %v392 = vadd.f32 %v388, %v391
    %vm393 = vweird.f32 %v388
    %v394 = vsel %vm393, %v388, %v392
    %s395 = vtos %v394
    %s396 = smul.f32 %s387, %s395
    %s397 = smul.f32 %s396, 0.1
    %s398 = sadd.f32 %s281, %s397
    %v399 = vand.u32 2147483647, %v35
    %v400 = vand.u32 2147483647, %v36
    %vm401 = vcmask 31744
    %v402 = vsel %vm401, %v399, 0.0
    %v403 = vsel %vm401, %v400, 0.0
    %v404 = vadd.f32 %v402, %v403
    %405 = vadd.xlane.f32.xlu0 %v404
    %v406 = vpop.xlane.xlu0 %405
    %v407 = vrot.slane %v406, 4
    %v408 = vadd.f32 %v406, %v407
    %v409 = vrot.slane %v408, 2
    %v410 = vadd.f32 %v408, %v409
    %v411 = vrot.slane %v410, 1
    %v412 = vadd.f32 %v410, %v411
    %s413 = vtos %v412
    %v414 = vrcp.pop 64.0
    %v415 = vmul.f32 64.0, %v414
    %v416 = vsub.f32 1.0, %v415
    %v417 = vmul.f32 %v414, %v416
    %v418 = vadd.f32 %v414, %v417
    %vm419 = vweird.f32 %v414
    %v420 = vsel %vm419, %v414, %v418
    %s421 = vtos %v420
    %s422 = smul.f32 %s413, %s421
    %s423 = smul.f32 %s422, 4.0
    %s424 = smul.f32 %s423, 0.01
    %s425 = sadd.f32 %s398, %s424
    %v426 = vmul.f32 %v31, %v31
    %v427 = vmul.f32 %v32, %v32
    %v428 = vlaneseq
    %v429 = vand.u32 %v428, 127
    %v430 = vsel %vm49, %v426, 0.0
    %431 = vadd.xlane.f32.xlu0 %v430
    %v432 = vpop.xlane.xlu0 %431
    %v433 = vsel %vm49, %v427, 0.0
    %434 = vadd.xlane.f32.xlu0 %v433
    %v435 = vpop.xlane.xlu0 %434
    %438 = vrot.lane.b32.xlu0 %v426, 96
    %v439 = vpop.permute.xlu0 %438
    %440 = vrot.lane.b32.xlu0 %v427, 96
    %v441 = vpop.permute.xlu0 %440
    %v444 = vsel %vm49, %v439, 0.0
    %445 = vadd.xlane.f32.xlu0 %v444
    %v446 = vpop.xlane.xlu0 %445
    %v447 = vsel %vm49, %v441, 0.0
    %448 = vadd.xlane.f32.xlu0 %v447
    %v449 = vpop.xlane.xlu0 %448
    %450 = vrot.lane.b32.xlu0 %v426, 64
    %v451 = vpop.permute.xlu0 %450
    %452 = vrot.lane.b32.xlu0 %v427, 64
    %v453 = vpop.permute.xlu0 %452
    %v456 = vsel %vm49, %v451, 0.0
    %457 = vadd.xlane.f32.xlu0 %v456
    %v458 = vpop.xlane.xlu0 %457
    %v459 = vsel %vm49, %v453, 0.0
    %460 = vadd.xlane.f32.xlu0 %v459
    %v461 = vpop.xlane.xlu0 %460
    %462 = vrot.lane.b32.xlu0 %v426, 32
    %v463 = vpop.permute.xlu0 %462
    %464 = vrot.lane.b32.xlu0 %v427, 32
    %v465 = vpop.permute.xlu0 %464
    %v468 = vsel %vm49, %v463, 0.0
    %469 = vadd.xlane.f32.xlu0 %v468
    %v470 = vpop.xlane.xlu0 %469
    %v471 = vsel %vm49, %v465, 0.0
    %472 = vadd.xlane.f32.xlu0 %v471
    %v473 = vpop.xlane.xlu0 %472
    %v474 = vsel %vm62, %v432, %v446
    %v475 = vsel %vm62, %v435, %v449
    %v476 = vsel %vm339, %v474, %v458
    %v477 = vsel %vm339, %v475, %v461
    %v478 = vsel %vm342, %v476, %v470
    %v479 = vsel %vm342, %v477, %v473
    %v480 = vrsqrt.pop %v478
    %v481 = vmul.f32 %v480, %v478
    %v482 = vmul.f32 %v481, %v480
    %v483 = vmul.f32 0.5, %v482
    %v484 = vsub.f32 1.5, %v483
    %v485 = vmul.f32 %v480, %v484
    %v486 = vmul.f32 %v478, %v485
    %vm487 = vcmp.eq.f32.partialorder %v478, inf
    %v488 = vsel %vm487, %v478, %v486
    %vm489 = vcmp.eq.f32.partialorder %v478, 0.0
    %v490 = vand.u32 %v478, 2147483648
    %v491 = vsel %vm489, %v490, %v488
    %v492 = vrsqrt.pop %v479
    %v493 = vmul.f32 %v492, %v479
    %v494 = vmul.f32 %v493, %v492
    %v495 = vmul.f32 0.5, %v494
    %v496 = vsub.f32 1.5, %v495
    %v497 = vmul.f32 %v492, %v496
    %v498 = vmul.f32 %v479, %v497
    %vm499 = vcmp.eq.f32.partialorder %v479, inf
    %v500 = vsel %vm499, %v479, %v498
    %vm501 = vcmp.eq.f32.partialorder %v479, 0.0
    %v502 = vand.u32 %v479, 2147483648
    %v503 = vsel %vm501, %v502, %v500
    %v504 = vmax.f32 %v491, 1e-12
    %v505 = vmax.f32 %v503, 1e-12
    %v506 = vrcp.pop %v504
    %v507 = vmul.f32 %v504, %v506
    %v508 = vsub.f32 1.0, %v507
    %v509 = vmul.f32 %v506, %v508
    %v510 = vadd.f32 %v506, %v509
    %vm511 = vweird.f32 %v504
    %vm512 = vweird.f32 %v506
    %vm513 = vmor %vm511, %vm512
    %v514 = vsel %vm513, %v506, %v510
    %v515 = vand.u32 2147483647, %v504
    %vm516 = vcmp.eq.f32.partialorder %v515, 8.507059e+37
    %v517 = vand.u32 %v504, 2147483648
    %v518 = vor.u32 1.1754944e-38, %v517
    %v519 = vsel %vm516, %v518, %v514
    %v520 = vmul.f32 1.0, %v519
    %v521 = vrcp.pop %v505
    %v522 = vmul.f32 %v505, %v521
    %v523 = vsub.f32 1.0, %v522
    %v524 = vmul.f32 %v521, %v523
    %v525 = vadd.f32 %v521, %v524
    %vm526 = vweird.f32 %v505
    %vm527 = vweird.f32 %v521
    %vm528 = vmor %vm526, %vm527
    %v529 = vsel %vm528, %v521, %v525
    %v530 = vand.u32 2147483647, %v505
    %vm531 = vcmp.eq.f32.partialorder %v530, 8.507059e+37
    %v532 = vand.u32 %v505, 2147483648
    %v533 = vor.u32 1.1754944e-38, %v532
    %v534 = vsel %vm531, %v533, %v529
    %v535 = vmul.f32 1.0, %v534
    %vm536 = vcmp.ge.s32.totalorder %v429, 32
    %538 = vset.pattern.permute.xlu0 1
    %539 = vperm.xlu0 %538, %v520
    %v540 = vpop.permute.xlu0 %539
    %543 = vset.pattern.permute.xlu0 1
    %544 = vperm.xlu0 %543, %v535
    %v545 = vpop.permute.xlu0 %544
    %547 = vset.pattern.permute.xlu0 0
    %548 = vperm.xlu0 %547, %v520
    %v549 = vpop.permute.xlu0 %548
    %551 = vset.pattern.permute.xlu0 0
    %552 = vperm.xlu0 %551, %v535
    %v553 = vpop.permute.xlu0 %552
    %v555 = vsel %vm536, %v540, %v549
    %v556 = vsel %vm536, %v545, %v553
    %vm557 = vcmp.ge.s32.totalorder %v429, 64
    %558 = vset.pattern.permute.xlu0 2
    %559 = vperm.xlu0 %558, %v520
    %v560 = vpop.permute.xlu0 %559
    %562 = vset.pattern.permute.xlu0 2
    %563 = vperm.xlu0 %562, %v535
    %v564 = vpop.permute.xlu0 %563
    %v566 = vsel %vm557, %v560, %v555
    %v567 = vsel %vm557, %v564, %v556
    %vm568 = vcmp.ge.s32.totalorder %v429, 96
    %569 = vset.pattern.permute.xlu0 3
    %570 = vperm.xlu0 %569, %v520
    %v571 = vpop.permute.xlu0 %570
    %573 = vset.pattern.permute.xlu0 3
    %574 = vperm.xlu0 %573, %v535
    %v575 = vpop.permute.xlu0 %574
    %v577 = vsel %vm568, %v571, %v566
    %v578 = vsel %vm568, %v575, %v567
    %v579 = vmul.f32 %v31, %v577
    %v580 = vmul.f32 %v32, %v578
    %583 = vrot.lane.b32.xlu0 %v579, 96
    %v584 = vpop.permute.xlu0 %583
    %585 = vrot.lane.b32.xlu0 %v580, 96
    %v586 = vpop.permute.xlu0 %585
    %587 = vrot.lane.b32.xlu0 %v579, 64
    %v588 = vpop.permute.xlu0 %587
    %589 = vrot.lane.b32.xlu0 %v580, 64
    %v590 = vpop.permute.xlu0 %589
    %591 = vrot.lane.b32.xlu0 %v579, 32
    %v592 = vpop.permute.xlu0 %591
    %593 = vrot.lane.b32.xlu0 %v580, 32
    %v594 = vpop.permute.xlu0 %593
    %v595 = vsel %vm49, %v579, 0
    %v597 = vsel %vm49, %v580, 0
    %v599 = vsel %vm49, %v584, 0
    %v601 = vsel %vm49, %v586, 0
    %v603 = vsel %vm49, %v588, 0
    %v605 = vsel %vm49, %v590, 0
    %v607 = vsel %vm49, %v592, 0
    %v609 = vsel %vm49, %v594, 0
    %611 = vmatpush.xpose.msra.mxu0 0.0
    %612 = vmatpush.xpose.msra.mxu0 0.0
    %613 = vmatpush.xpose.msra.mxu0 0.0
    %614 = vmatpush.xpose.msra.mxu0 0.0
    %615 = vmatpush.xpose.msra.mxu0 0.0
    %616 = vmatpush.xpose.msra.mxu0 0.0
    %617 = vmatpush.xpose.msra.mxu0 0.0
    %618 = vmatpush.xpose.msra.mxu0 0.0
    %619 = vmatpush.xpose.msra.mxu0 %v609
    %620 = vmatpush.xpose.msra.mxu0 %v607
    %621 = vmatpush.xpose.msra.mxu0 %v605
    %622 = vmatpush.xpose.msra.mxu0 %v603
    %623 = vmatpush.xpose.msra.mxu0 %v601
    %624 = vmatpush.xpose.msra.mxu0 %v599
    %625 = vmatpush.xpose.msra.mxu0 %v597
    %626 = vmatpush.xpose.msra.mxu0 %v595
    %627 = vmatmul.f32.gmra.mxu0 %v595
    %v628 = vpop.f32.mrf.mxu0
    %v629 = vadd.f32 0.0, %v628
    %630 = vmatmul.f32.gmra.mxu0 %v597
    %v631 = vpop.f32.mrf.mxu0
    %v632 = vadd.f32 0.0, %v631
    %633 = vmatmul.f32.gmra.mxu0 %v599
    %v634 = vpop.f32.mrf.mxu0
    %v635 = vadd.f32 0.0, %v634
    %636 = vmatmul.f32.gmra.mxu0 %v601
    %v637 = vpop.f32.mrf.mxu0
    %v638 = vadd.f32 0.0, %v637
    %639 = vmatmul.f32.gmra.mxu0 %v603
    %v640 = vpop.f32.mrf.mxu0
    %v641 = vadd.f32 0.0, %v640
    %642 = vmatmul.f32.gmra.mxu0 %v605
    %v643 = vpop.f32.mrf.mxu0
    %v644 = vadd.f32 0.0, %v643
    %645 = vmatmul.f32.gmra.mxu0 %v607
    %v646 = vpop.f32.mrf.mxu0
    %647 = vmatmul.f32.gmra.mxu0 %v609
    %v648 = vpop.f32.mrf.mxu0
    %649 = vdwg.mxu0
    %v650 = vmul.f32 %v629, 14.285714
    %v651 = vmul.f32 %v632, 14.285714
    %v652 = vmul.f32 %v635, 14.285714
    %v653 = vmul.f32 %v638, 14.285714
    %v654 = vmul.f32 %v641, 14.285714
    %v655 = vmul.f32 %v644, 14.285714
    %v656 = vlaneseq
    %v657 = vshrl.u32 %v656, 7
    %v658 = vadd.s32 %v657, 8
    %vm659 = vcmp.eq.s32.totalorder %v657, %v429
    %vm660 = vcmp.eq.s32.totalorder %v658, %v429
    %vm661 = vcmask 261248
    %v662 = vsel %vm661, %v650, -inf
    %663 = vmax.xlane.f32.xlu0 %v662
    %v664 = vpop.xlane.xlu0 %663
    %v665 = vsel %vm661, %v651, -inf
    %666 = vmax.xlane.f32.xlu0 %v665
    %v667 = vpop.xlane.xlu0 %666
    %v668 = vsub.f32 %v650, %v664
    %v669 = vsub.f32 %v651, %v667
    %v670 = vmul.f32 %v668, 1.442695
    %v671 = vpow.pop %v670
    %v672 = vmul.f32 %v669, 1.442695
    %v673 = vpow.pop %v672
    %676 = vrot.lane.b32.xlu0 %v671, 112
    %v677 = vpop.permute.xlu0 %676
    %678 = vrot.lane.b32.xlu0 %v673, 112
    %v679 = vpop.permute.xlu0 %678
    %vm682 = vcmask 130048
    %v683 = vsel %vm682, %v677, 0.0
    %684 = vadd.xlane.f32.xlu0 %v683
    %v685 = vpop.xlane.xlu0 %684
    %v686 = vsel %vm682, %v679, 0.0
    %687 = vadd.xlane.f32.xlu0 %v686
    %v688 = vpop.xlane.xlu0 %687
    %v689 = vlog2.pop %v685
    %v690 = vmul.f32 %v689, 0.6931472
    %v691 = vlog2.pop %v688
    %v692 = vmul.f32 %v691, 0.6931472
    %v693 = vadd.f32 %v690, %v664
    %v694 = vadd.f32 %v692, %v667
    %697 = vrot.lane.b32.xlu0 %v650, 112
    %v698 = vpop.permute.xlu0 %697
    %699 = vrot.lane.b32.xlu0 %v651, 112
    %v700 = vpop.permute.xlu0 %699
    %v703 = vsel %vm659, %v698, 0.0
    %v704 = vsel %vm660, %v700, 0.0
    %v705 = vsel %vm682, %v703, 0.0
    %706 = vadd.xlane.f32.xlu0 %v705
    %v707 = vpop.xlane.xlu0 %706
    %v708 = vsel %vm682, %v704, 0.0
    %709 = vadd.xlane.f32.xlu0 %v708
    %v710 = vpop.xlane.xlu0 %709
    %v711 = vsub.f32 %v693, %v707
    %v712 = vsub.f32 %v694, %v710
    %v713 = vsel %vm62, %v711, 0.0
    %v714 = vsel %vm62, %v712, 0.0
    %v715 = vadd.f32 %v713, %v714
    %716 = vadd.xlane.f32.xlu0 %v715
    %v717 = vpop.xlane.xlu0 %716
    %v718 = vrot.slane %v717, 4
    %v719 = vadd.f32 %v717, %v718
    %v720 = vrot.slane %v719, 2
    %v721 = vadd.f32 %v719, %v720
    %v722 = vrot.slane %v721, 1
    %v723 = vadd.f32 %v721, %v722
    %s724 = vtos %v723
    %v725 = vrcp.pop 16.0
    %v726 = vmul.f32 16.0, %v725
    %v727 = vsub.f32 1.0, %v726
    %v728 = vmul.f32 %v725, %v727
    %v729 = vadd.f32 %v725, %v728
    %vm730 = vweird.f32 %v725
    %v731 = vsel %vm730, %v725, %v729
    %s732 = vtos %v731
    %s733 = smul.f32 %s724, %s732
    %s734 = sadd.f32 %s733, 0.0
    %vm735 = vcmask 392448
    %v736 = vsel %vm735, %v650, -inf
    %737 = vmax.xlane.f32.xlu0 %v736
    %v738 = vpop.xlane.xlu0 %737
    %v739 = vsel %vm735, %v651, -inf
    %740 = vmax.xlane.f32.xlu0 %v739
    %v741 = vpop.xlane.xlu0 %740
    %v742 = vsub.f32 %v650, %v738
    %v743 = vsub.f32 %v651, %v741
    %v744 = vmul.f32 %v742, 1.442695
    %v745 = vpow.pop %v744
    %v746 = vmul.f32 %v743, 1.442695
    %v747 = vpow.pop %v746
    %750 = vrot.lane.b32.xlu0 %v745, 96
    %v751 = vpop.permute.xlu0 %750
    %752 = vrot.lane.b32.xlu0 %v747, 96
    %v753 = vpop.permute.xlu0 %752
    %v756 = vsel %vm682, %v751, 0.0
    %757 = vadd.xlane.f32.xlu0 %v756
    %v758 = vpop.xlane.xlu0 %757
    %v759 = vsel %vm682, %v753, 0.0
    %760 = vadd.xlane.f32.xlu0 %v759
    %v761 = vpop.xlane.xlu0 %760
    %v762 = vlog2.pop %v758
    %v763 = vmul.f32 %v762, 0.6931472
    %v764 = vlog2.pop %v761
    %v765 = vmul.f32 %v764, 0.6931472
    %v766 = vadd.f32 %v763, %v738
    %v767 = vadd.f32 %v765, %v741
    %768 = vrot.lane.b32.xlu0 %v650, 96
    %v769 = vpop.permute.xlu0 %768
    %770 = vrot.lane.b32.xlu0 %v651, 96
    %v771 = vpop.permute.xlu0 %770
    %v774 = vsel %vm659, %v769, 0.0
    %v775 = vsel %vm660, %v771, 0.0
    %v776 = vsel %vm682, %v774, 0.0
    %777 = vadd.xlane.f32.xlu0 %v776
    %v778 = vpop.xlane.xlu0 %777
    %v779 = vsel %vm682, %v775, 0.0
    %780 = vadd.xlane.f32.xlu0 %v779
    %v781 = vpop.xlane.xlu0 %780
    %v782 = vsub.f32 %v766, %v778
    %v783 = vsub.f32 %v767, %v781
    %v784 = vsel %vm62, %v782, 0.0
    %v785 = vsel %vm62, %v783, 0.0
    %v786 = vadd.f32 %v784, %v785
    %787 = vadd.xlane.f32.xlu0 %v786
    %v788 = vpop.xlane.xlu0 %787
    %v789 = vrot.slane %v788, 4
    %v790 = vadd.f32 %v788, %v789
    %v791 = vrot.slane %v790, 2
    %v792 = vadd.f32 %v790, %v791
    %v793 = vrot.slane %v792, 1
    %v794 = vadd.f32 %v792, %v793
    %s795 = vtos %v794
    %v796 = vrcp.pop 16.0
    %v797 = vmul.f32 16.0, %v796
    %v798 = vsub.f32 1.0, %v797
    %v799 = vmul.f32 %v796, %v798
    %v800 = vadd.f32 %v796, %v799
    %vm801 = vweird.f32 %v796
    %v802 = vsel %vm801, %v796, %v800
    %s803 = vtos %v802
    %s804 = smul.f32 %s795, %s803
    %s805 = sadd.f32 %s734, %s804
    %vm806 = vcmask 523648
    %v807 = vsel %vm806, %v650, -inf
    %808 = vmax.xlane.f32.xlu0 %v807
    %v809 = vpop.xlane.xlu0 %808
    %v810 = vsel %vm806, %v651, -inf
    %811 = vmax.xlane.f32.xlu0 %v810
    %v812 = vpop.xlane.xlu0 %811
    %v813 = vsub.f32 %v650, %v809
    %v814 = vsub.f32 %v651, %v812
    %v815 = vmul.f32 %v813, 1.442695
    %v816 = vpow.pop %v815
    %v817 = vmul.f32 %v814, 1.442695
    %v818 = vpow.pop %v817
    %821 = vrot.lane.b32.xlu0 %v816, 80
    %v822 = vpop.permute.xlu0 %821
    %823 = vrot.lane.b32.xlu0 %v818, 80
    %v824 = vpop.permute.xlu0 %823
    %v827 = vsel %vm682, %v822, 0.0
    %828 = vadd.xlane.f32.xlu0 %v827
    %v829 = vpop.xlane.xlu0 %828
    %v830 = vsel %vm682, %v824, 0.0
    %831 = vadd.xlane.f32.xlu0 %v830
    %v832 = vpop.xlane.xlu0 %831
    %v833 = vlog2.pop %v829
    %v834 = vmul.f32 %v833, 0.6931472
    %v835 = vlog2.pop %v832
    %v836 = vmul.f32 %v835, 0.6931472
    %v837 = vadd.f32 %v834, %v809
    %v838 = vadd.f32 %v836, %v812
    %839 = vrot.lane.b32.xlu0 %v650, 80
    %v840 = vpop.permute.xlu0 %839
    %841 = vrot.lane.b32.xlu0 %v651, 80
    %v842 = vpop.permute.xlu0 %841
    %v845 = vsel %vm659, %v840, 0.0
    %v846 = vsel %vm660, %v842, 0.0
    %v847 = vsel %vm682, %v845, 0.0
    %848 = vadd.xlane.f32.xlu0 %v847
    %v849 = vpop.xlane.xlu0 %848
    %v850 = vsel %vm682, %v846, 0.0
    %851 = vadd.xlane.f32.xlu0 %v850
    %v852 = vpop.xlane.xlu0 %851
    %v853 = vsub.f32 %v837, %v849
    %v854 = vsub.f32 %v838, %v852
    %v855 = vsel %vm62, %v853, 0.0
    %v856 = vsel %vm62, %v854, 0.0
    %v857 = vadd.f32 %v855, %v856
    %858 = vadd.xlane.f32.xlu0 %v857
    %v859 = vpop.xlane.xlu0 %858
    %v860 = vrot.slane %v859, 4
    %v861 = vadd.f32 %v859, %v860
    %v862 = vrot.slane %v861, 2
    %v863 = vadd.f32 %v861, %v862
    %v864 = vrot.slane %v863, 1
    %v865 = vadd.f32 %v863, %v864
    %s866 = vtos %v865
    %v867 = vrcp.pop 16.0
    %v868 = vmul.f32 16.0, %v867
    %v869 = vsub.f32 1.0, %v868
    %v870 = vmul.f32 %v867, %v869
    %v871 = vadd.f32 %v867, %v870
    %vm872 = vweird.f32 %v867
    %v873 = vsel %vm872, %v867, %v871
    %s874 = vtos %v873
    %s875 = smul.f32 %s866, %s874
    %s876 = sadd.f32 %s805, %s875
    %v877 = vsel %vm735, %v652, -inf
    %878 = vmax.xlane.f32.xlu0 %v877
    %v879 = vpop.xlane.xlu0 %878
    %v880 = vsel %vm735, %v653, -inf
    %881 = vmax.xlane.f32.xlu0 %v880
    %v882 = vpop.xlane.xlu0 %881
    %v883 = vsub.f32 %v652, %v879
    %v884 = vsub.f32 %v653, %v882
    %v885 = vmul.f32 %v883, 1.442695
    %v886 = vpow.pop %v885
    %v887 = vmul.f32 %v884, 1.442695
    %v888 = vpow.pop %v887
    %891 = vrot.lane.b32.xlu0 %v886, 96
    %v892 = vpop.permute.xlu0 %891
    %893 = vrot.lane.b32.xlu0 %v888, 96
    %v894 = vpop.permute.xlu0 %893
    %v897 = vsel %vm682, %v892, 0.0
    %898 = vadd.xlane.f32.xlu0 %v897
    %v899 = vpop.xlane.xlu0 %898
    %v900 = vsel %vm682, %v894, 0.0
    %901 = vadd.xlane.f32.xlu0 %v900
    %v902 = vpop.xlane.xlu0 %901
    %v903 = vlog2.pop %v899
    %v904 = vmul.f32 %v903, 0.6931472
    %v905 = vlog2.pop %v902
    %v906 = vmul.f32 %v905, 0.6931472
    %v907 = vadd.f32 %v904, %v879
    %v908 = vadd.f32 %v906, %v882
    %911 = vrot.lane.b32.xlu0 %v652, 96
    %v912 = vpop.permute.xlu0 %911
    %913 = vrot.lane.b32.xlu0 %v653, 96
    %v914 = vpop.permute.xlu0 %913
    %v917 = vsel %vm659, %v912, 0.0
    %v918 = vsel %vm660, %v914, 0.0
    %v919 = vsel %vm682, %v917, 0.0
    %920 = vadd.xlane.f32.xlu0 %v919
    %v921 = vpop.xlane.xlu0 %920
    %v922 = vsel %vm682, %v918, 0.0
    %923 = vadd.xlane.f32.xlu0 %v922
    %v924 = vpop.xlane.xlu0 %923
    %v925 = vsub.f32 %v907, %v921
    %v926 = vsub.f32 %v908, %v924
    %v927 = vsel %vm62, %v925, 0.0
    %v928 = vsel %vm62, %v926, 0.0
    %v929 = vadd.f32 %v927, %v928
    %930 = vadd.xlane.f32.xlu0 %v929
    %v931 = vpop.xlane.xlu0 %930
    %v932 = vrot.slane %v931, 4
    %v933 = vadd.f32 %v931, %v932
    %v934 = vrot.slane %v933, 2
    %v935 = vadd.f32 %v933, %v934
    %v936 = vrot.slane %v935, 1
    %v937 = vadd.f32 %v935, %v936
    %s938 = vtos %v937
    %v939 = vrcp.pop 16.0
    %v940 = vmul.f32 16.0, %v939
    %v941 = vsub.f32 1.0, %v940
    %v942 = vmul.f32 %v939, %v941
    %v943 = vadd.f32 %v939, %v942
    %vm944 = vweird.f32 %v939
    %v945 = vsel %vm944, %v939, %v943
    %s946 = vtos %v945
    %s947 = smul.f32 %s938, %s946
    %s948 = sadd.f32 %s876, %s947
    %v949 = vsel %vm806, %v652, -inf
    %950 = vmax.xlane.f32.xlu0 %v949
    %v951 = vpop.xlane.xlu0 %950
    %v952 = vsel %vm806, %v653, -inf
    %953 = vmax.xlane.f32.xlu0 %v952
    %v954 = vpop.xlane.xlu0 %953
    %v955 = vsub.f32 %v652, %v951
    %v956 = vsub.f32 %v653, %v954
    %v957 = vmul.f32 %v955, 1.442695
    %v958 = vpow.pop %v957
    %v959 = vmul.f32 %v956, 1.442695
    %v960 = vpow.pop %v959
    %963 = vrot.lane.b32.xlu0 %v958, 80
    %v964 = vpop.permute.xlu0 %963
    %965 = vrot.lane.b32.xlu0 %v960, 80
    %v966 = vpop.permute.xlu0 %965
    %v969 = vsel %vm682, %v964, 0.0
    %970 = vadd.xlane.f32.xlu0 %v969
    %v971 = vpop.xlane.xlu0 %970
    %v972 = vsel %vm682, %v966, 0.0
    %973 = vadd.xlane.f32.xlu0 %v972
    %v974 = vpop.xlane.xlu0 %973
    %v975 = vlog2.pop %v971
    %v976 = vmul.f32 %v975, 0.6931472
    %v977 = vlog2.pop %v974
    %v978 = vmul.f32 %v977, 0.6931472
    %v979 = vadd.f32 %v976, %v951
    %v980 = vadd.f32 %v978, %v954
    %981 = vrot.lane.b32.xlu0 %v652, 80
    %v982 = vpop.permute.xlu0 %981
    %983 = vrot.lane.b32.xlu0 %v653, 80
    %v984 = vpop.permute.xlu0 %983
    %v987 = vsel %vm659, %v982, 0.0
    %v988 = vsel %vm660, %v984, 0.0
    %v989 = vsel %vm682, %v987, 0.0
    %990 = vadd.xlane.f32.xlu0 %v989
    %v991 = vpop.xlane.xlu0 %990
    %v992 = vsel %vm682, %v988, 0.0
    %993 = vadd.xlane.f32.xlu0 %v992
    %v994 = vpop.xlane.xlu0 %993
    %v995 = vsub.f32 %v979, %v991
    %v996 = vsub.f32 %v980, %v994
    %v997 = vsel %vm62, %v995, 0.0
    %v998 = vsel %vm62, %v996, 0.0
    %v999 = vadd.f32 %v997, %v998
    %1000 = vadd.xlane.f32.xlu0 %v999
    %v1001 = vpop.xlane.xlu0 %1000
    %v1002 = vrot.slane %v1001, 4
    %v1003 = vadd.f32 %v1001, %v1002
    %v1004 = vrot.slane %v1003, 2
    %v1005 = vadd.f32 %v1003, %v1004
    %v1006 = vrot.slane %v1005, 1
    %v1007 = vadd.f32 %v1005, %v1006
    %s1008 = vtos %v1007
    %v1009 = vrcp.pop 16.0
    %v1010 = vmul.f32 16.0, %v1009
    %v1011 = vsub.f32 1.0, %v1010
    %v1012 = vmul.f32 %v1009, %v1011
    %v1013 = vadd.f32 %v1009, %v1012
    %vm1014 = vweird.f32 %v1009
    %v1015 = vsel %vm1014, %v1009, %v1013
    %s1016 = vtos %v1015
    %s1017 = smul.f32 %s1008, %s1016
    %s1018 = sadd.f32 %s948, %s1017
    %v1019 = vsel %vm806, %v654, -inf
    %1020 = vmax.xlane.f32.xlu0 %v1019
    %v1021 = vpop.xlane.xlu0 %1020
    %v1022 = vsel %vm806, %v655, -inf
    %1023 = vmax.xlane.f32.xlu0 %v1022
    %v1024 = vpop.xlane.xlu0 %1023
    %v1025 = vsub.f32 %v654, %v1021
    %v1026 = vsub.f32 %v655, %v1024
    %v1027 = vmul.f32 %v1025, 1.442695
    %v1028 = vpow.pop %v1027
    %v1029 = vmul.f32 %v1026, 1.442695
    %v1030 = vpow.pop %v1029
    %1033 = vrot.lane.b32.xlu0 %v1028, 80
    %v1034 = vpop.permute.xlu0 %1033
    %1035 = vrot.lane.b32.xlu0 %v1030, 80
    %v1036 = vpop.permute.xlu0 %1035
    %v1039 = vsel %vm682, %v1034, 0.0
    %1040 = vadd.xlane.f32.xlu0 %v1039
    %v1041 = vpop.xlane.xlu0 %1040
    %v1042 = vsel %vm682, %v1036, 0.0
    %1043 = vadd.xlane.f32.xlu0 %v1042
    %v1044 = vpop.xlane.xlu0 %1043
    %v1045 = vlog2.pop %v1041
    %v1046 = vmul.f32 %v1045, 0.6931472
    %v1047 = vlog2.pop %v1044
    %v1048 = vmul.f32 %v1047, 0.6931472
    %v1049 = vadd.f32 %v1046, %v1021
    %v1050 = vadd.f32 %v1048, %v1024
    %1053 = vrot.lane.b32.xlu0 %v654, 80
    %v1054 = vpop.permute.xlu0 %1053
    %1055 = vrot.lane.b32.xlu0 %v655, 80
    %v1056 = vpop.permute.xlu0 %1055
    %v1059 = vsel %vm659, %v1054, 0.0
    %v1060 = vsel %vm660, %v1056, 0.0
    %v1061 = vsel %vm682, %v1059, 0.0
    %1062 = vadd.xlane.f32.xlu0 %v1061
    %v1063 = vpop.xlane.xlu0 %1062
    %v1064 = vsel %vm682, %v1060, 0.0
    %1065 = vadd.xlane.f32.xlu0 %v1064
    %v1066 = vpop.xlane.xlu0 %1065
    %v1067 = vsub.f32 %v1049, %v1063
    %v1068 = vsub.f32 %v1050, %v1066
    %v1069 = vsel %vm62, %v1067, 0.0
    %v1070 = vsel %vm62, %v1068, 0.0
    %v1071 = vadd.f32 %v1069, %v1070
    %1072 = vadd.xlane.f32.xlu0 %v1071
    %v1073 = vpop.xlane.xlu0 %1072
    %v1074 = vrot.slane %v1073, 4
    %v1075 = vadd.f32 %v1073, %v1074
    %v1076 = vrot.slane %v1075, 2
    %v1077 = vadd.f32 %v1075, %v1076
    %v1078 = vrot.slane %v1077, 1
    %v1079 = vadd.f32 %v1077, %v1078
    %s1080 = vtos %v1079
    %v1081 = vrcp.pop 16.0
    %v1082 = vmul.f32 16.0, %v1081
    %v1083 = vsub.f32 1.0, %v1082
    %v1084 = vmul.f32 %v1081, %v1083
    %v1085 = vadd.f32 %v1081, %v1084
    %vm1086 = vweird.f32 %v1081
    %v1087 = vsel %vm1086, %v1081, %v1085
    %s1088 = vtos %v1087
    %s1089 = smul.f32 %s1080, %s1088
    %s1090 = sadd.f32 %s1018, %s1089
    %v1091 = vrcp.pop 6.0
    %v1092 = vmul.f32 6.0, %v1091
    %v1093 = vsub.f32 1.0, %v1092
    %v1094 = vmul.f32 %v1091, %v1093
    %v1095 = vadd.f32 %v1091, %v1094
    %vm1096 = vweird.f32 %v1091
    %v1097 = vsel %vm1096, %v1091, %v1095
    %s1098 = vtos %v1097
    %s1099 = smul.f32 %s1090, %s1098
    %s1100 = smul.f32 %s1099, 0.1
    %s1101 = sadd.f32 %s425, %s1100
    %s1102 = scalar_lea.smem [#allocation5], 0
    %1103 = sst [smem:[%s1102]] %s1101
    // Predicated region
    $region18: #{tpu_custom_call.1} parent=1 // pred_check
      _
    $region19: #{tpu_custom_call.1} parent=1 // pred_check_branch
      %1105 = sbr.rel (0) target = $region21
    $region20: #{tpu_custom_call.1} parent=1 // pred_region
      %1107 = vsyncadd [#allocation4], 0
      %s1109 = sshll.u32 %s3, 4
      %s1110 = int_to_ptr.hbm [resolvable:$true] %s1109
      %1112 = dma.smem_to_hbm [#allocation5], 16, %s1110, [#allocation4]
    $region21: #{tpu_custom_call.1} parent=1 // pred_fallthru
      _
    // Predicated region
    $region22: #{tpu_custom_call.1} parent=1 // pred_check
      _
    $region23: #{tpu_custom_call.1} parent=1 // pred_check_branch
      %1114 = sbr.rel (0) target = $region25
    $region24: #{tpu_custom_call.1} parent=1 // pred_region
      %1116 = dma.done [#allocation4], 16
    $region25: #{tpu_custom_call.1} parent=1 // pred_fallthru
      _
    %1117 = sfence
    %1118 = vsyncpa [#allocation3], 1
    %1119 = vsyncpa [#allocation4], 1

</llo_original>
